<compile_context>
chip_gen: v5e
topology: v5e:2x2
jax: 0.10.0
libtpu: 0.0.40
codegen_flags: <defaults>
</compile_context>

<pallas_src>
import functools

import jax
import jax.numpy as jnp
from jax.experimental import pallas as pl
from jax.experimental.pallas import tpu as pltpu

LN_EPS = 1e-5  # nn.LayerNorm default


def _round_up(x, m):
    return (x + m - 1) // m * m


def _cdiv(a, b):
    return -(-a // b)


def _vmem_plan():
    """Generation-aware (budget_bytes, vmem_limit_bytes)."""
    try:
        cap = int(pltpu.get_tpu_info().vmem_capacity_bytes)
    except Exception:
        cap = 0
    if cap >= 100 * 1024 * 1024:                     # v5e / v6e: 128 MiB physical
        return 48 * 1024 * 1024, 64 * 1024 * 1024
    return 20 * 1024 * 1024, 32 * 1024 * 1024        # v7x (64 MiB / TC) or unknown


def _plan_tiles(B, S, K, D, D_pad, budget):
    """Pick (tk, k_tiles, K_pad, tn, n_tiles, S_pad) under a VMEM budget."""
    K128 = _round_up(K, 128)
    # Keep the (worst-case double-buffered) weight chunk at <= budget/4 so the
    # streamed input/output tiles get most of the VMEM; otherwise tile K.
    if 2 * D_pad * K128 * 2 <= budget // 4:
        tk = K128
    else:
        tk = (budget // 4) // (2 * D_pad * 2)
        tk = max(128, (tk // 128) * 128)
        tk = min(tk, K128)
    k_tiles = _cdiv(K128, tk)
    K_pad = k_tiles * tk

    fixed = 2 * D_pad * tk * 2 + 2 * D_pad * 8 * 4        # weight + param slabs
    per_col = 2 * tk * 2 + 2 * D * 4 + D_pad * 4          # in bf16 x2, out f32 x2, acc f32
    tn = (budget - fixed) // per_col
    tn = max(128, min(int(tn), 2048))                     # review: lift cap to ~2048
    if S <= 128:
        tn = S                                            # full extent -> legal
    else:
        if tn >= S:
            tn = S                                        # full extent -> legal
        else:
            tn = max(128, (tn // 128) * 128)
        if B * _cdiv(S, tn) < 2:
            # Guarantee >= 2 parallel grid steps so both v7x TensorCores work.
            tn = min(S, max(128, _round_up(_cdiv(S, 2), 128)))
    n_tiles = _cdiv(S, tn)
    S_pad = n_tiles * tn
    return tk, k_tiles, K_pad, tn, n_tiles, S_pad


def _patch_embed_kernel(x_ref, w_ref, p_ref, o_ref, acc_ref, *, true_d):
    # x_ref : (1, tk, tn)   bf16  patch columns (K rows, spatial positions in lanes)
    # w_ref : (D_pad, tk)   bf16  projection weight chunk (resident when k_tiles==1)
    # p_ref : (D_pad, 8)    f32   col0 = conv bias, col1 = LN gamma, col2 = LN beta
    # o_ref : (1, D, tn)    f32   NCHW-layout output tile (channels x spatial)
    # acc_ref:(D_pad, tn)   f32   K accumulator
    k = pl.program_id(2)

    @pl.when(k == 0)
    def _():
        acc_ref[...] = jnp.zeros_like(acc_ref)

    acc_ref[...] += jnp.dot(w_ref[...], x_ref[0],
                            preferred_element_type=jnp.float32)

    @pl.when(k == pl.num_programs(2) - 1)
    def _():
        params = p_ref[...]
        y = acc_ref[...] + params[:, 0:1]                   # conv bias (0 in pad rows)
        d_pad = y.shape[0]
        inv_d = 1.0 / float(true_d)
        # Padded channel rows are exactly zero (zero weight + zero bias), so the
        # sum over D_pad rows equals the sum over the true D.
        mean = jnp.sum(y, axis=0, keepdims=True) * inv_d
        centered = y - mean
        # Two-pass variance; each of the (d_pad - true_d) zero rows contributes
        # exactly mean^2 to the square-sum, subtract it back out.
        sq = jnp.sum(centered * centered, axis=0, keepdims=True)
        sq = sq - float(d_pad - true_d) * mean * mean
        var = jnp.maximum(sq * inv_d, 0.0)
        y = centered * jax.lax.rsqrt(var + LN_EPS)
        y = y * params[:, 1:2] + params[:, 2:3]             # LN gamma / beta
        o_ref[0] = y[:true_d, :].astype(o_ref.dtype)


@functools.partial(jax.jit, static_argnames=("patch_size", "single_buffer_residents"))
def _fixed_patch_embed_impl(x, conv_w, conv_b, ln_w, ln_b, *, patch_size,
                            single_buffer_residents):
    B, C, H, W = x.shape
    D = conv_w.shape[0]
    p = patch_size
    assert H % p == 0 and W % p == 0
    Hp, Wp = H // p, W // p
    S = Hp * Wp
    K = C * p * p
    D_pad = _round_up(D, 8)

    budget, vmem_limit = _vmem_plan()
    tk, k_tiles, K_pad, tn, n_tiles, S_pad = _plan_tiles(B, S, K, D, D_pad, budget)

    # --- glue: patchify NCHW -> feature-major (B, K, S) patch matrix, bf16.
    # K is (c, kh, kw) to match PyTorch Conv2d weight flattening; S is (hp, wp),
    # so the kernel's (D, tn) tiles land directly in NCHW layout and the final
    # reshape below is free (no output relayout pass).
    # TODO(synk): this transpose is still one full HBM pass over the input; it
    # disappears with NHWC input, or by doing the (C,kh,kw)->K regroup in-kernel
    # from raw (C, p, W) row-bands when patch_size % 8 == 0.
    pt = x.astype(jnp.bfloat16).reshape(B, C, Hp, p, Wp, p)
    pt = pt.transpose(0, 1, 3, 5, 2, 4).reshape(B, K, S)
    pt = jnp.pad(pt, ((0, 0), (0, K_pad - K), (0, S_pad - S)))

    # Projection weight (D, C, p, p) -> (D_pad, K_pad), bf16, zero-padded.
    w_t = conv_w.reshape(D, K).astype(jnp.bfloat16)
    w_t = jnp.pad(w_t, ((0, D_pad - D), (0, K_pad - K)))

    # Resident param slab: col0 bias, col1 gamma, col2 beta (zero in pad rows).
    params = jnp.zeros((D_pad, 8), jnp.float32)
    params = params.at[:D, 0].set(conv_b.astype(jnp.float32))
    params = params.at[:D, 1].set(ln_w.astype(jnp.float32))
    params = params.at[:D, 2].set(ln_b.astype(jnp.float32))

    def _maybe_single(shape, index_map, single):
        # Resident operands (constant index_map) gain nothing from double
        # buffering; single-buffer them to halve their VMEM footprint.
        if single:
            return pl.BlockSpec(shape, index_map, pipeline_mode=pl.Buffered(1))
        return pl.BlockSpec(shape, index_map)

    resident_w = single_buffer_residents and k_tiles == 1

    cost = pl.CostEstimate(
        flops=2 * B * S_pad * K_pad * D_pad + 8 * B * S_pad * D_pad,
        transcendentals=B * S_pad,
        bytes_accessed=pt.size * 2 + w_t.size * 2 + params.size * 4 + B * D * S * 4)

    kernel = functools.partial(_patch_embed_kernel, true_d=D)
    out = pl.pallas_call(
        kernel,
        out_shape=jax.ShapeDtypeStruct((B, D, S), jnp.float32),
        grid_spec=pltpu.PrefetchScalarGridSpec(
            num_scalar_prefetch=0,
            grid=(B, n_tiles, k_tiles),
            in_specs=[
                pl.BlockSpec((1, tk, tn), lambda b, i, k: (b, k, i)),   # patches
                _maybe_single((D_pad, tk), lambda b, i, k: (0, k), resident_w),
                _maybe_single((D_pad, 8), lambda b, i, k: (0, 0),
                              single_buffer_residents),
            ],
            out_specs=pl.BlockSpec((1, D, tn), lambda b, i, k: (b, 0, i)),
            scratch_shapes=[pltpu.VMEM((D_pad, tn), jnp.float32)],
        ),
        compiler_params=pltpu.CompilerParams(
            dimension_semantics=("parallel", "parallel", "arbitrary"),
            vmem_limit_bytes=vmem_limit),
        cost_estimate=cost,
    )(pt, w_t, params)

    # (B, D, Hp*Wp) -> (B, D, Hp, Wp): pure metadata reshape, no relayout.
    return out.reshape(B, D, Hp, Wp)


def fixed_patch_embed(x, conv_w, conv_b, ln_w, ln_b, *, patch_size):
    """x: (B, C, H, W) NCHW f32. conv_w: (D, C, p, p). Returns NCHW (B, D, Hp, Wp)."""
    try:
        return _fixed_patch_embed_impl(
            x, conv_w, conv_b, ln_w, ln_b,
            patch_size=patch_size, single_buffer_residents=True)
    except Exception:
        # pl.Buffered(1) on resident operands is a pure VMEM optimization; fall
        # back to default double-buffering if this JAX build rejects it.
        return _fixed_patch_embed_impl(
            x, conv_w, conv_b, ln_w, ln_b,
            patch_size=patch_size, single_buffer_residents=False)


def _reference_f32(x, conv_w, conv_b, ln_w, ln_b, patch_size):
    """Pure-f32 JAX reference of Conv2d(stride=kernel) + LayerNorm2d."""
    B, C, H, W = x.shape
    D = conv_w.shape[0]
    p = patch_size
    Hp, Wp = H // p, W // p
    patches = x.reshape(B, C, Hp, p, Wp, p).transpose(0, 2, 4, 1, 3, 5)
    patches = patches.reshape(B, Hp, Wp, C * p * p)
    y = jnp.einsum("bhwk,dk->bhwd", patches, conv_w.reshape(D, -1)) + conv_b
    mean = jnp.mean(y, axis=-1, keepdims=True)
    var = jnp.mean(jnp.square(y - mean), axis=-1, keepdims=True)
    y = (y - mean) * jax.lax.rsqrt(var + LN_EPS)
    y = y * ln_w + ln_b
    return y.transpose(0, 3, 1, 2)


def _reference_bf16_proj(x, conv_w, conv_b, ln_w, ln_b, patch_size):
    """Reference matching the kernel numerics: bf16 projection inputs,
    f32 accumulation, f32 bias/LayerNorm."""
    B, C, H, W = x.shape
    D = conv_w.shape[0]
    p = patch_size
    Hp, Wp = H // p, W // p
    patches = x.astype(jnp.bfloat16).reshape(B, C, Hp, p, Wp, p)
    patches = patches.transpose(0, 2, 4, 1, 3, 5).reshape(B, Hp, Wp, C * p * p)
    w = conv_w.reshape(D, -1).astype(jnp.bfloat16)
    y = jnp.einsum("bhwk,dk->bhwd", patches, w,
                   preferred_element_type=jnp.float32) + conv_b
    mean = jnp.mean(y, axis=-1, keepdims=True)
    var = jnp.mean(jnp.square(y - mean), axis=-1, keepdims=True)
    y = (y - mean) * jax.lax.rsqrt(var + LN_EPS)
    y = y * ln_w + ln_b
    return y.transpose(0, 3, 1, 2)


if __name__ == "__main__":
    # Small shapes consistent with the module: input_size=16, patch_size=8,
    # in_channels=4, embed_dims=32  ->  x: (2, 4, 16, 16), out: (2, 32, 2, 2).
    B, C, H, W = 2, 4, 16, 16
    patch_size = 8
    embed_dims = 32

    key = jax.random.PRNGKey(0)
    kx, kw, kb, kg, kbt = jax.random.split(key, 5)
    x = jax.random.normal(kx, (B, C, H, W), dtype=jnp.float32)
    conv_w = jax.random.normal(kw, (embed_dims, C, patch_size, patch_size),
                               dtype=jnp.float32) * 0.05
    conv_b = jax.random.normal(kb, (embed_dims,), dtype=jnp.float32) * 0.05
    ln_w = jnp.ones((embed_dims,), jnp.float32) + 0.1 * jax.random.normal(
        kg, (embed_dims,), dtype=jnp.float32)
    ln_b = 0.1 * jax.random.normal(kbt, (embed_dims,), dtype=jnp.float32)

    out = fixed_patch_embed(x, conv_w, conv_b, ln_w, ln_b,
                            patch_size=patch_size)
    out = jax.block_until_ready(out)
    assert out.shape == (B, embed_dims, H // patch_size, W // patch_size)

    ref_exact = _reference_bf16_proj(x, conv_w, conv_b, ln_w, ln_b, patch_size)
    ref_f32 = _reference_f32(x, conv_w, conv_b, ln_w, ln_b, patch_size)
    assert jnp.allclose(out, ref_exact, atol=1e-3, rtol=1e-3), \
        "mismatch vs bf16-matched reference"
    assert jnp.allclose(out, ref_f32, atol=5e-2, rtol=5e-2), \
        "mismatch vs f32 reference"

    print("KERNEL_OK")
</pallas_src>

<mosaic_0001>
module attributes {stable_mosaic.version = 11 : i64} {
  func.func @_patch_embed_kernel(%arg0: i32, %arg1: i32, %arg2: i32, %arg3: memref<1x256x4xbf16, #tpu.memory_space<vmem>>, %arg4: memref<32x256xbf16, #tpu.memory_space<vmem>>, %arg5: memref<32x8xf32, #tpu.memory_space<vmem>>, %arg6: memref<1x32x4xf32, #tpu.memory_space<vmem>>, %arg7: memref<32x4xf32, #tpu.memory_space<vmem>>) attributes {dimension_semantics = [#tpu.dimension_semantics<parallel>, #tpu.dimension_semantics<parallel>, #tpu.dimension_semantics<arbitrary>], iteration_bounds = array<i64: 2, 1, 1>, scalar_prefetch = 0 : i64, scratch_operands = 1 : i64, tpu.core_type = #tpu.core_type<tc>, window_params = [{transform_indices = @transform_0, window_bounds = array<i64: 1, 256, 4>}, {pipeline_mode = #tpu.pipeline_mode<synchronous>, transform_indices = @transform_1, window_bounds = array<i64: 32, 256>}, {pipeline_mode = #tpu.pipeline_mode<synchronous>, transform_indices = @transform_2, window_bounds = array<i64: 32, 8>}, {transform_indices = @transform_3, window_bounds = array<i64: 1, 32, 4>}]} {
    %c0_i32 = arith.constant 0 : i32
    %0 = arith.cmpi eq, %arg2, %c0_i32 : i32
    %1 = arith.extui %0 : i1 to i32
    %c0_i32_0 = arith.constant 0 : i32
    %2 = arith.cmpi ne, %1, %c0_i32_0 : i32
    scf.if %2 {
      %cst_11 = arith.constant 0.000000e+00 : f32
      %13 = vector.broadcast %cst_11 : f32 to vector<32x4xf32>
      %c0_12 = arith.constant 0 : index
      %c0_13 = arith.constant 0 : index
      %14 = vector.load %arg7[%c0_12, %c0_13] : memref<32x4xf32, #tpu.memory_space<vmem>>, vector<32x4xf32>
      tpu.vector_store %arg7[%c0_12, %c0_13], %13 {strides = array<i32>} : memref<32x4xf32, #tpu.memory_space<vmem>>, vector<32x4xf32>,
    } else {
    }
    %c0 = arith.constant 0 : index
    %c0_1 = arith.constant 0 : index
    %3 = vector.load %arg7[%c0, %c0_1] : memref<32x4xf32, #tpu.memory_space<vmem>>, vector<32x4xf32>
    %c0_2 = arith.constant 0 : index
    %c0_3 = arith.constant 0 : index
    %4 = vector.load %arg4[%c0_2, %c0_3] : memref<32x256xbf16, #tpu.memory_space<vmem>>, vector<32x256xbf16>
    %c0_4 = arith.constant 0 : index
    %c0_5 = arith.constant 0 : index
    %c0_6 = arith.constant 0 : index
    %5 = vector.load %arg3[%c0_4, %c0_5, %c0_6] : memref<1x256x4xbf16, #tpu.memory_space<vmem>>, vector<1x256x4xbf16>
    %6 = vector.shape_cast %5 : vector<1x256x4xbf16> to vector<256x4xbf16>
    %cst = arith.constant dense<0.000000e+00> : vector<32x4xf32>
    %7 = tpu.matmul %4, %6, %cst {dimension_numbers = #tpu.dot_dimension_numbers<[1], [0], [0], [1], [0, 0, 1, 1], [], []>} : vector<32x256xbf16>, vector<256x4xbf16>, vector<32x4xf32> -> vector<32x4xf32>
    %8 = arith.addf %3, %7 : vector<32x4xf32>
    %c0_7 = arith.constant 0 : index
    %c0_8 = arith.constant 0 : index
    %9 = vector.load %arg7[%c0_7, %c0_8] : memref<32x4xf32, #tpu.memory_space<vmem>>, vector<32x4xf32>
    tpu.vector_store %arg7[%c0_7, %c0_8], %8 {strides = array<i32>} : memref<32x4xf32, #tpu.memory_space<vmem>>, vector<32x4xf32>,
    %c0_i32_9 = arith.constant 0 : i32
    %10 = arith.cmpi eq, %arg2, %c0_i32_9 : i32
    %11 = arith.extui %10 : i1 to i32
    %c0_i32_10 = arith.constant 0 : i32
    %12 = arith.cmpi ne, %11, %c0_i32_10 : i32
    scf.if %12 {
      %c0_11 = arith.constant 0 : index
      %c0_12 = arith.constant 0 : index
      %13 = vector.load %arg5[%c0_11, %c0_12] : memref<32x8xf32, #tpu.memory_space<vmem>>, vector<32x8xf32>
      %c0_13 = arith.constant 0 : index
      %c0_14 = arith.constant 0 : index
      %14 = vector.load %arg7[%c0_13, %c0_14] : memref<32x4xf32, #tpu.memory_space<vmem>>, vector<32x4xf32>
      %15 = vector.extract_strided_slice %13 {offsets = [0, 0], sizes = [32, 1], strides = [1, 1]} : vector<32x8xf32> to vector<32x1xf32>
      %16 = vector.broadcast %15 : vector<32x1xf32> to vector<32x4xf32>
      %17 = arith.addf %14, %16 : vector<32x4xf32>
      %cst_15 = arith.constant dense<0.000000e+00> : vector<4xf32>
      %18 = vector.multi_reduction <add>, %17, %cst_15 [0] : vector<32x4xf32> to vector<4xf32>
      %19 = vector.shape_cast %18 : vector<4xf32> to vector<1x4xf32>
      %cst_16 = arith.constant 3.125000e-02 : f32
      %20 = vector.broadcast %cst_16 : f32 to vector<1x4xf32>
      %21 = arith.mulf %19, %20 : vector<1x4xf32>
      %22 = vector.broadcast %21 : vector<1x4xf32> to vector<32x4xf32>
      %23 = arith.subf %17, %22 : vector<32x4xf32>
      %24 = arith.mulf %23, %23 : vector<32x4xf32>
      %cst_17 = arith.constant dense<0.000000e+00> : vector<4xf32>
      %25 = vector.multi_reduction <add>, %24, %cst_17 [0] : vector<32x4xf32> to vector<4xf32>
      %26 = vector.shape_cast %25 : vector<4xf32> to vector<1x4xf32>
      %cst_18 = arith.constant 0.000000e+00 : f32
      %27 = vector.broadcast %cst_18 : f32 to vector<1x4xf32>
      %28 = arith.mulf %27, %21 : vector<1x4xf32>
      %29 = arith.mulf %28, %21 : vector<1x4xf32>
      %30 = arith.subf %26, %29 : vector<1x4xf32>
      %cst_19 = arith.constant 3.125000e-02 : f32
      %31 = vector.broadcast %cst_19 : f32 to vector<1x4xf32>
      %32 = arith.mulf %30, %31 : vector<1x4xf32>
      %cst_20 = arith.constant 0.000000e+00 : f32
      %33 = vector.broadcast %cst_20 : f32 to vector<1x4xf32>
      %34 = arith.maximumf %32, %33 : vector<1x4xf32>
      %cst_21 = arith.constant 9.99999974E-6 : f32
      %35 = vector.broadcast %cst_21 : f32 to vector<1x4xf32>
      %36 = arith.addf %34, %35 : vector<1x4xf32>
      %37 = math.rsqrt %36 : vector<1x4xf32>
      %38 = vector.broadcast %37 : vector<1x4xf32> to vector<32x4xf32>
      %39 = arith.mulf %23, %38 : vector<32x4xf32>
      %40 = vector.extract_strided_slice %13 {offsets = [0, 1], sizes = [32, 1], strides = [1, 1]} : vector<32x8xf32> to vector<32x1xf32>
      %41 = vector.broadcast %40 : vector<32x1xf32> to vector<32x4xf32>
      %42 = arith.mulf %39, %41 : vector<32x4xf32>
      %43 = vector.extract_strided_slice %13 {offsets = [0, 2], sizes = [32, 1], strides = [1, 1]} : vector<32x8xf32> to vector<32x1xf32>
      %44 = vector.broadcast %43 : vector<32x1xf32> to vector<32x4xf32>
      %45 = arith.addf %42, %44 : vector<32x4xf32>
      %c0_22 = arith.constant 0 : index
      %c0_23 = arith.constant 0 : index
      %c0_24 = arith.constant 0 : index
      %46 = vector.load %arg6[%c0_22, %c0_23, %c0_24] : memref<1x32x4xf32, #tpu.memory_space<vmem>>, vector<1x32x4xf32>
      %47 = vector.shape_cast %46 : vector<1x32x4xf32> to vector<32x4xf32>
      %48 = vector.shape_cast %45 : vector<32x4xf32> to vector<1x32x4xf32>
      tpu.vector_store %arg6[%c0_22, %c0_23, %c0_24], %48 {strides = array<i32>} : memref<1x32x4xf32, #tpu.memory_space<vmem>>, vector<1x32x4xf32>,
    } else {
    }
    return
  }
  func.func @transform_0(%arg0: i32, %arg1: i32, %arg2: i32) -> (i32, i32, i32) {
    %c0_i32 = arith.constant 0 : i32
    return %arg0, %arg2, %arg1 : i32, i32, i32
  }
  func.func @transform_1(%arg0: i32, %arg1: i32, %arg2: i32) -> (i32, i32) {
    %c0_i32 = arith.constant 0 : i32
    %c0_i32_0 = arith.constant 0 : i32
    return %c0_i32, %arg2 : i32, i32
  }
  func.func @transform_2(%arg0: i32, %arg1: i32, %arg2: i32) -> (i32, i32) {
    %c0_i32 = arith.constant 0 : i32
    %c0_i32_0 = arith.constant 0 : i32
    %c0_i32_1 = arith.constant 0 : i32
    return %c0_i32, %c0_i32_0 : i32, i32
  }
  func.func @transform_3(%arg0: i32, %arg1: i32, %arg2: i32) -> (i32, i32, i32) {
    %c0_i32 = arith.constant 0 : i32
    %c0_i32_0 = arith.constant 0 : i32
    return %arg0, %c0_i32, %arg1 : i32, i32, i32
  }
}

module attributes {stable_mosaic.version = 11 : i64} {
  func.func @_patch_embed_kernel(%arg0: i32, %arg1: i32, %arg2: i32, %arg3: memref<1x256x4xbf16, #tpu.memory_space<vmem>>, %arg4: memref<32x256xbf16, #tpu.memory_space<vmem>>, %arg5: memref<32x8xf32, #tpu.memory_space<vmem>>, %arg6: memref<1x32x4xf32, #tpu.memory_space<vmem>>, %arg7: memref<32x4xf32, #tpu.memory_space<vmem>>) attributes {dimension_semantics = [#tpu.dimension_semantics<parallel>, #tpu.dimension_semantics<parallel>, #tpu.dimension_semantics<arbitrary>], iteration_bounds = array<i64: 2, 1, 1>, scalar_prefetch = 0 : i64, scratch_operands = 1 : i64, tpu.core_type = #tpu.core_type<tc>, window_params = [{transform_indices = @transform_0, window_bounds = array<i64: 1, 256, 4>}, {transform_indices = @transform_1, window_bounds = array<i64: 32, 256>}, {pipeline_mode = #tpu.pipeline_mode<synchronous>, transform_indices = @transform_2, window_bounds = array<i64: 32, 8>}, {transform_indices = @transform_3, window_bounds = array<i64: 1, 32, 4>}]} {
    %c0_i32 = arith.constant 0 : i32
    %0 = arith.cmpi eq, %arg2, %c0_i32 : i32
    %1 = arith.extui %0 : i1 to i32
    %c0_i32_0 = arith.constant 0 : i32
    %2 = arith.cmpi ne, %1, %c0_i32_0 : i32
    scf.if %2 {
      %cst_11 = arith.constant 0.000000e+00 : f32
      %13 = vector.broadcast %cst_11 : f32 to vector<32x4xf32>
      %c0_12 = arith.constant 0 : index
      %c0_13 = arith.constant 0 : index
      %14 = vector.load %arg7[%c0_12, %c0_13] : memref<32x4xf32, #tpu.memory_space<vmem>>, vector<32x4xf32>
      tpu.vector_store %arg7[%c0_12, %c0_13], %13 {strides = array<i32>} : memref<32x4xf32, #tpu.memory_space<vmem>>, vector<32x4xf32>,
    } else {
    }
    %c0 = arith.constant 0 : index
    %c0_1 = arith.constant 0 : index
    %3 = vector.load %arg7[%c0, %c0_1] : memref<32x4xf32, #tpu.memory_space<vmem>>, vector<32x4xf32>
    %c0_2 = arith.constant 0 : index
    %c0_3 = arith.constant 0 : index
    %4 = vector.load %arg4[%c0_2, %c0_3] : memref<32x256xbf16, #tpu.memory_space<vmem>>, vector<32x256xbf16>
    %c0_4 = arith.constant 0 : index
    %c0_5 = arith.constant 0 : index
    %c0_6 = arith.constant 0 : index
    %5 = vector.load %arg3[%c0_4, %c0_5, %c0_6] : memref<1x256x4xbf16, #tpu.memory_space<vmem>>, vector<1x256x4xbf16>
    %6 = vector.shape_cast %5 : vector<1x256x4xbf16> to vector<256x4xbf16>
    %cst = arith.constant dense<0.000000e+00> : vector<32x4xf32>
    %7 = tpu.matmul %4, %6, %cst {dimension_numbers = #tpu.dot_dimension_numbers<[1], [0], [0], [1], [0, 0, 1, 1], [], []>} : vector<32x256xbf16>, vector<256x4xbf16>, vector<32x4xf32> -> vector<32x4xf32>
    %8 = arith.addf %3, %7 : vector<32x4xf32>
    %c0_7 = arith.constant 0 : index
    %c0_8 = arith.constant 0 : index
    %9 = vector.load %arg7[%c0_7, %c0_8] : memref<32x4xf32, #tpu.memory_space<vmem>>, vector<32x4xf32>
    tpu.vector_store %arg7[%c0_7, %c0_8], %8 {strides = array<i32>} : memref<32x4xf32, #tpu.memory_space<vmem>>, vector<32x4xf32>,
    %c0_i32_9 = arith.constant 0 : i32
    %10 = arith.cmpi eq, %arg2, %c0_i32_9 : i32
    %11 = arith.extui %10 : i1 to i32
    %c0_i32_10 = arith.constant 0 : i32
    %12 = arith.cmpi ne, %11, %c0_i32_10 : i32
    scf.if %12 {
      %c0_11 = arith.constant 0 : index
      %c0_12 = arith.constant 0 : index
      %13 = vector.load %arg5[%c0_11, %c0_12] : memref<32x8xf32, #tpu.memory_space<vmem>>, vector<32x8xf32>
      %c0_13 = arith.constant 0 : index
      %c0_14 = arith.constant 0 : index
      %14 = vector.load %arg7[%c0_13, %c0_14] : memref<32x4xf32, #tpu.memory_space<vmem>>, vector<32x4xf32>
      %15 = vector.extract_strided_slice %13 {offsets = [0, 0], sizes = [32, 1], strides = [1, 1]} : vector<32x8xf32> to vector<32x1xf32>
      %16 = vector.broadcast %15 : vector<32x1xf32> to vector<32x4xf32>
      %17 = arith.addf %14, %16 : vector<32x4xf32>
      %cst_15 = arith.constant dense<0.000000e+00> : vector<4xf32>
      %18 = vector.multi_reduction <add>, %17, %cst_15 [0] : vector<32x4xf32> to vector<4xf32>
      %19 = vector.shape_cast %18 : vector<4xf32> to vector<1x4xf32>
      %cst_16 = arith.constant 3.125000e-02 : f32
      %20 = vector.broadcast %cst_16 : f32 to vector<1x4xf32>
      %21 = arith.mulf %19, %20 : vector<1x4xf32>
      %22 = vector.broadcast %21 : vector<1x4xf32> to vector<32x4xf32>
      %23 = arith.subf %17, %22 : vector<32x4xf32>
      %24 = arith.mulf %23, %23 : vector<32x4xf32>
      %cst_17 = arith.constant dense<0.000000e+00> : vector<4xf32>
      %25 = vector.multi_reduction <add>, %24, %cst_17 [0] : vector<32x4xf32> to vector<4xf32>
      %26 = vector.shape_cast %25 : vector<4xf32> to vector<1x4xf32>
      %cst_18 = arith.constant 0.000000e+00 : f32
      %27 = vector.broadcast %cst_18 : f32 to vector<1x4xf32>
      %28 = arith.mulf %27, %21 : vector<1x4xf32>
      %29 = arith.mulf %28, %21 : vector<1x4xf32>
      %30 = arith.subf %26, %29 : vector<1x4xf32>
      %cst_19 = arith.constant 3.125000e-02 : f32
      %31 = vector.broadcast %cst_19 : f32 to vector<1x4xf32>
      %32 = arith.mulf %30, %31 : vector<1x4xf32>
      %cst_20 = arith.constant 0.000000e+00 : f32
      %33 = vector.broadcast %cst_20 : f32 to vector<1x4xf32>
      %34 = arith.maximumf %32, %33 : vector<1x4xf32>
      %cst_21 = arith.constant 9.99999974E-6 : f32
      %35 = vector.broadcast %cst_21 : f32 to vector<1x4xf32>
      %36 = arith.addf %34, %35 : vector<1x4xf32>
      %37 = math.rsqrt %36 : vector<1x4xf32>
      %38 = vector.broadcast %37 : vector<1x4xf32> to vector<32x4xf32>
      %39 = arith.mulf %23, %38 : vector<32x4xf32>
      %40 = vector.extract_strided_slice %13 {offsets = [0, 1], sizes = [32, 1], strides = [1, 1]} : vector<32x8xf32> to vector<32x1xf32>
      %41 = vector.broadcast %40 : vector<32x1xf32> to vector<32x4xf32>
      %42 = arith.mulf %39, %41 : vector<32x4xf32>
      %43 = vector.extract_strided_slice %13 {offsets = [0, 2], sizes = [32, 1], strides = [1, 1]} : vector<32x8xf32> to vector<32x1xf32>
      %44 = vector.broadcast %43 : vector<32x1xf32> to vector<32x4xf32>
      %45 = arith.addf %42, %44 : vector<32x4xf32>
      %c0_22 = arith.constant 0 : index
      %c0_23 = arith.constant 0 : index
      %c0_24 = arith.constant 0 : index
      %46 = vector.load %arg6[%c0_22, %c0_23, %c0_24] : memref<1x32x4xf32, #tpu.memory_space<vmem>>, vector<1x32x4xf32>
      %47 = vector.shape_cast %46 : vector<1x32x4xf32> to vector<32x4xf32>
      %48 = vector.shape_cast %45 : vector<32x4xf32> to vector<1x32x4xf32>
      tpu.vector_store %arg6[%c0_22, %c0_23, %c0_24], %48 {strides = array<i32>} : memref<1x32x4xf32, #tpu.memory_space<vmem>>, vector<1x32x4xf32>,
    } else {
    }
    return
  }
  func.func @transform_0(%arg0: i32, %arg1: i32, %arg2: i32) -> (i32, i32, i32) {
    %c0_i32 = arith.constant 0 : i32
    return %arg0, %arg2, %arg1 : i32, i32, i32
  }
  func.func @transform_1(%arg0: i32, %arg1: i32, %arg2: i32) -> (i32, i32) {
    %c0_i32 = arith.constant 0 : i32
    %c0_i32_0 = arith.constant 0 : i32
    return %c0_i32, %arg2 : i32, i32
  }
  func.func @transform_2(%arg0: i32, %arg1: i32, %arg2: i32) -> (i32, i32) {
    %c0_i32 = arith.constant 0 : i32
    %c0_i32_0 = arith.constant 0 : i32
    %c0_i32_1 = arith.constant 0 : i32
    return %c0_i32, %c0_i32_0 : i32, i32
  }
  func.func @transform_3(%arg0: i32, %arg1: i32, %arg2: i32) -> (i32, i32, i32) {
    %c0_i32 = arith.constant 0 : i32
    %c0_i32_0 = arith.constant 0 : i32
    return %arg0, %c0_i32, %arg1 : i32, i32, i32
  }
}

</mosaic_0001>

<llo_original>
// kernel: _fixed_patch_embed_impl.1
$region0: #{_fixed_patch_embed_impl.1}
  #allocation0 [shape = 'u32[]', space=smem, size = 0x4, offset = 0x4, fixed_abs, tag = 'smem constant byte address 0x4 - core index']
  #allocation1 [shape = 'u32[72,128]{1,0:T(1,128)}', space=vmem, size = 0x9000, scoped, tag = 'internal scratch']
  #allocation2 [shape = 'f32[32,4]{1,0:T(8,128)}', space=vmem, size = 0x4000, scoped, tag = 'scratch operand']
  %s0 = inlined_call_operand.vmem [shape: bf16[2,256,4], index: 0, kind: input, shape index: {}]
  %s1 = inlined_call_operand.vmem [shape: bf16[32,256], index: 1, kind: input, shape index: {}]
  %s2 = inlined_call_operand.vmem [shape: f32[32,8], index: 2, kind: input, shape index: {}]
  %s3 = inlined_call_operand.vmem [shape: f32[2,32,4], index: 3, kind: output, shape index: {}]
  %s4 = sld [smem:[#allocation0]]
  $region53: #{_fixed_patch_embed_impl.1} parent=0
    _
  %s6 = ssub.s32 1, %s4
  %s7 = scalar_select 0, %s6, %s4
  loop: start=0, step=1, limit=4
  $region2: #{_fixed_patch_embed_impl.1} parent=0 // loop_pre_header
    _
  $region3: #{_fixed_patch_embed_impl.1} parent=0 // loop_header
    %s9 = sphi 0, %s13
    %p10 = scmp.ge.s32.totalorder %s9, 4
    %s16 = sphi 0, %s35
    %s17 = sphi 0, %s31
    %s18 = sphi 0, %s27
    %s19 = sphi 0, %s16
    %s20 = sphi 0, %s17
    %s21 = sphi 0, %s18
    %s22 = sphi 0, %s19
    %s23 = sphi 0, %s20
    %s24 = sphi 0, %s21
    %s42 = sphi 0, %s44
    %s45 = sphi 0, %s42
    %s46 = sphi 0, %s45
    %s62 = sphi 0, %s46
    %s68 = sphi 0, %s70
    %s71 = sphi 0, %s68
    %s72 = sphi 0, %s71
    %s88 = sphi 0, %s72
    %s92 = sphi 0, %s92
    %s94 = sphi 0, %s92
    %s95 = sphi 0, %s94
    %s109 = sphi 0, %s95
    %s117 = sphi 0, %s119
    %s120 = sphi 0, %s117
    %s121 = sphi 0, %s120
    %s137 = sphi 0, %s121
  $region4: #{_fixed_patch_embed_impl.1} parent=0 // loop_header_branch
    %12 = sbr.rel (%p10) target = $region8
  $region5: #{_fixed_patch_embed_impl.1} parent=0 // loop_body
    %s14 = ssub.s32 %s9, 1
    %s15 = ssub.s32 %s9, 2
    %s25 = sadd.s32 1, %s18
    %p26 = scmp.ge.s32.totalorder %s25, 1
    %s27 = scalar_select %p26, 0, %s25
    %s28 = sadd.s32 1, %s17
    %s29 = scalar_select %p26, %s28, %s17
    %p30 = scmp.ge.s32.totalorder %s29, 1
    %s31 = scalar_select %p30, 0, %s29
    %s32 = sadd.s32 1, %s16
    %s33 = scalar_select %p30, %s32, %s16
    %p34 = scmp.ge.s32.totalorder %s33, 2
    %s35 = scalar_select %p34, 0, %s33
    %s36 = ssub.s32 %s16, %s35
    %s37 = ssub.s32 %s18, %s27
    %s38 = sor.u32 %s36, %s37
    %s39 = ssub.s32 %s17, %s31
    %s40 = sor.u32 %s38, %s39
    %p41 = scmp.eq.s32.totalorder %s40, 0
    %s43 = sadd.s32 %s42, 1
    %s44 = scalar_select %p41, %s42, %s43
    %p47 = pneg %p41
    %p48 = scmp.eq.s32.totalorder %s9, 1
    %p49 = por %p47, %p48
    %p50 = scmp.ne.s32.totalorder %s42, %s45
    %p51 = scmp.eq.s32.totalorder %s9, 0
    %p52 = por %p50, %p51
    %p53 = scmp.ne.s32.totalorder %s42, %s45
    %p54 = scmp.eq.s32.totalorder %s14, 1
    %p55 = por %p53, %p54
    %p56 = scmp.ne.s32.totalorder %s45, %s46
    %p57 = scmp.eq.s32.totalorder %s14, 0
    %p58 = por %p56, %p57
    %p59 = scmp.ne.s32.totalorder %s45, %s46
    %p60 = scmp.eq.s32.totalorder %s15, 1
    %p61 = por %p59, %p60
    %p63 = scmp.ne.s32.totalorder %s46, %s62
    %p64 = scmp.eq.s32.totalorder %s15, 0
    %p65 = por %p63, %p64
    %s66 = ssub.s32 %s18, %s27
    %p67 = scmp.eq.s32.totalorder %s66, 0
    %s69 = sadd.s32 %s68, 1
    %s70 = scalar_select %p67, %s68, %s69
    %p73 = pneg %p67
    %p74 = scmp.eq.s32.totalorder %s9, 1
    %p75 = por %p73, %p74
    %p76 = scmp.ne.s32.totalorder %s68, %s71
    %p77 = scmp.eq.s32.totalorder %s9, 0
    %p78 = por %p76, %p77
    %p79 = scmp.ne.s32.totalorder %s68, %s71
    %p80 = scmp.eq.s32.totalorder %s14, 1
    %p81 = por %p79, %p80
    %p82 = scmp.ne.s32.totalorder %s71, %s72
    %p83 = scmp.eq.s32.totalorder %s14, 0
    %p84 = por %p82, %p83
    %p85 = scmp.ne.s32.totalorder %s71, %s72
    %p86 = scmp.eq.s32.totalorder %s15, 1
    %p87 = por %p85, %p86
    %p89 = scmp.ne.s32.totalorder %s72, %s88
    %p90 = scmp.eq.s32.totalorder %s15, 0
    %p91 = por %p89, %p90
    %s93 = sadd.s32 %s92, 1
    %p96 = scmp.eq.s32.totalorder %s9, 1
    %p97 = scmp.ne.s32.totalorder %s92, %s94
    %p98 = scmp.eq.s32.totalorder %s9, 0
    %p99 = por %p97, %p98
    %p100 = scmp.ne.s32.totalorder %s92, %s94
    %p101 = scmp.eq.s32.totalorder %s14, 1
    %p102 = por %p100, %p101
    %p103 = scmp.ne.s32.totalorder %s94, %s95
    %p104 = scmp.eq.s32.totalorder %s14, 0
    %p105 = por %p103, %p104
    %p106 = scmp.ne.s32.totalorder %s94, %s95
    %p107 = scmp.eq.s32.totalorder %s15, 1
    %p108 = por %p106, %p107
    %p110 = scmp.ne.s32.totalorder %s95, %s109
    %p111 = scmp.eq.s32.totalorder %s15, 0
    %p112 = por %p110, %p111
    %s113 = ssub.s32 %s16, %s35
    %s114 = ssub.s32 %s17, %s31
    %s115 = sor.u32 %s113, %s114
    %p116 = scmp.eq.s32.totalorder %s115, 0
    %s118 = sadd.s32 %s117, 1
    %s119 = scalar_select %p116, %s117, %s118
    %p122 = pneg %p116
    %p123 = scmp.eq.s32.totalorder %s9, 1
    %p124 = por %p122, %p123
    %p125 = scmp.ne.s32.totalorder %s117, %s120
    %p126 = scmp.eq.s32.totalorder %s9, 0
    %p127 = por %p125, %p126
    %p128 = scmp.ne.s32.totalorder %s117, %s120
    %p129 = scmp.eq.s32.totalorder %s14, 1
    %p130 = por %p128, %p129
    %p131 = scmp.ne.s32.totalorder %s120, %s121
    %p132 = scmp.eq.s32.totalorder %s14, 0
    %p133 = por %p131, %p132
    %p134 = scmp.ne.s32.totalorder %s120, %s121
    %p135 = scmp.eq.s32.totalorder %s15, 1
    %p136 = por %p134, %p135
    %p138 = scmp.ne.s32.totalorder %s121, %s137
    %p139 = scmp.eq.s32.totalorder %s15, 0
    %p140 = por %p138, %p139
    %p141 = scmp.le.s32.totalorder 1, %s9
    %p142 = scmp.lt.s32.totalorder %s9, 3
    %p143 = pnand %p141, %p142
    %p144 = pneg %p143
    // Predicated region
    $region9: #{_fixed_patch_embed_impl.1} parent=5 // pred_check
      _
    $region10: #{_fixed_patch_embed_impl.1} parent=5 // pred_check_branch
      %146 = sbr.rel (%p143) target = $region12
    $region11: #{_fixed_patch_embed_impl.1} parent=5 // pred_region
      %s147 = ssub.s32 %s9, 1
      // Predicated region
      $region13: #{_fixed_patch_embed_impl.1} parent=11 // pred_check
        %p148 = pneg %p84
      $region14: #{_fixed_patch_embed_impl.1} parent=11 // pred_check_branch
        %150 = sbr.rel (%p148) target = $region16
      $region15: #{_fixed_patch_embed_impl.1} parent=11 // pred_region
        %s151 = smul.u32 2, %s21
        %p152 = scmp.lt.s32.totalorder %s151, 1
        %s153 = scalar_select %p152, %s151, 1
        %s154 = smul.addr %s153, 4
        %s155 = scalar_lea.vmem %s1, %s154
        %s156 = smul.u32 2, %s21
      $region16: #{_fixed_patch_embed_impl.1} parent=11 // pred_fallthru
        _
      // Predicated region
      $region17: #{_fixed_patch_embed_impl.1} parent=11 // pred_check
        %p157 = pneg %p105
      $region18: #{_fixed_patch_embed_impl.1} parent=11 // pred_check_branch
        %159 = sbr.rel (%p157) target = $region20
      $region19: #{_fixed_patch_embed_impl.1} parent=11 // pred_region
        _
      $region20: #{_fixed_patch_embed_impl.1} parent=11 // pred_fallthru
        _
    $region12: #{_fixed_patch_embed_impl.1} parent=5 // pred_fallthru
      _
    %p160 = scmp.lt.s32.totalorder %s9, 2
    // Predicated region
    $region21: #{_fixed_patch_embed_impl.1} parent=5 // pred_check
      %p161 = pneg %p160
    $region22: #{_fixed_patch_embed_impl.1} parent=5 // pred_check_branch
      %163 = sbr.rel (%p161) target = $region24
    $region23: #{_fixed_patch_embed_impl.1} parent=5 // pred_region
      // Predicated region
      $region25: #{_fixed_patch_embed_impl.1} parent=23 // pred_check
        %p164 = pneg %p52
      $region26: #{_fixed_patch_embed_impl.1} parent=23 // pred_check_branch
        %166 = sbr.rel (%p164) target = $region28
      $region27: #{_fixed_patch_embed_impl.1} parent=23 // pred_region
        %s167 = smul.u32 32, %s18
        %p168 = scmp.lt.s32.totalorder %s16, 1
        %s169 = scalar_select %p168, %s16, 1
        %p170 = scmp.lt.s32.totalorder %s167, 31
        %s171 = scalar_select %p170, %s167, 31
        %p172 = scmp.lt.s32.totalorder %s17, 0
        %s173 = scalar_select %p172, %s17, 0
        %s174 = sadd.s32 %s173, %s171
        %s175 = smul.addr %s169, 32
        %s176 = sadd.s32 %s174, %s175
        %s177 = smul.addr %s176, 4
        %s178 = scalar_lea.vmem %s0, %s177
        %s179 = smul.u32 32, %s18
      $region28: #{_fixed_patch_embed_impl.1} parent=23 // pred_fallthru
        _
    $region24: #{_fixed_patch_embed_impl.1} parent=5 // pred_fallthru
      _
    %p180 = scmp.le.s32.totalorder 1, %s9
    %p181 = scmp.lt.s32.totalorder %s9, 3
    %p182 = pnand %p180, %p181
    %p183 = pneg %p182
    // Predicated region
    $region29: #{_fixed_patch_embed_impl.1} parent=5 // pred_check
      _
    $region30: #{_fixed_patch_embed_impl.1} parent=5 // pred_check_branch
      %185 = sbr.rel (%p182) target = $region32
    $region31: #{_fixed_patch_embed_impl.1} parent=5 // pred_region
      %s186 = ssub.s32 %s9, 1
      %s187 = smul.u32 32, %s21
      %p188 = scmp.lt.s32.totalorder %s19, 1
      %s189 = scalar_select %p188, %s19, 1
      %p190 = scmp.lt.s32.totalorder %s187, 31
      %s191 = scalar_select %p190, %s187, 31
      %p192 = scmp.lt.s32.totalorder %s20, 0
      %s193 = scalar_select %p192, %s20, 0
      %s194 = sadd.s32 %s193, %s191
      %s195 = smul.addr %s189, 32
      %s196 = sadd.s32 %s194, %s195
      %s197 = smul.addr %s196, 4
      %s198 = scalar_lea.vmem %s0, %s197
      %p199 = pneg %p58
      %p200 = pneg %p55
      %s201 = smul.u32 2, %s21
      %p202 = scmp.lt.s32.totalorder %s201, 1
      %s203 = scalar_select %p202, %s201, 1
      %s204 = smul.addr %s203, 4
      %s205 = scalar_lea.vmem %s1, %s204
      %p206 = pneg %p84
      %p207 = pneg %p81
      %p208 = pneg %p105
      %p209 = pneg %p102
      %p210 = pneg %p133
      %p211 = pneg %p130
      %p212 = scmp.lt.s32.totalorder %s19, 1
      %s213 = scalar_select %p212, %s19, 1
      %p214 = scmp.lt.s32.totalorder %s20, 0
      %s215 = scalar_select %p214, %s20, 0
      %s216 = smul.addr %s213, 4
      %s217 = sadd.s32 %s215, %s216
      %s218 = smul.addr %s217, 8
      %s219 = scalar_lea.vmem %s3, %s218
      %s220 = smul.u32 32, %s21
      %p221 = scmp.lt.s32.totalorder %s19, 1
      %s222 = scalar_select %p221, %s19, 1
      %p223 = scmp.lt.s32.totalorder %s220, 31
      %s224 = scalar_select %p223, %s220, 31
      %p225 = scmp.lt.s32.totalorder %s20, 0
      %s226 = scalar_select %p225, %s20, 0
      %s227 = sadd.s32 %s226, %s224
      %s228 = smul.addr %s222, 32
      %s229 = sadd.s32 %s227, %s228
      %s230 = smul.addr %s229, 4
      %s231 = scalar_lea.vmem %s0, %s230
      %s232 = smul.u32 32, %s21
      %s233 = smul.u32 2, %s21
      %p234 = scmp.lt.s32.totalorder %s233, 1
      %s235 = scalar_select %p234, %s233, 1
      %s236 = smul.addr %s235, 4
      %s237 = scalar_lea.vmem %s1, %s236
      %s238 = smul.u32 2, %s21
      %p239 = scmp.lt.s32.totalorder %s19, 1
      %s240 = scalar_select %p239, %s19, 1
      %p241 = scmp.lt.s32.totalorder %s20, 0
      %s242 = scalar_select %p241, %s20, 0
      %s243 = smul.addr %s240, 4
      %s244 = sadd.s32 %s242, %s243
      %s245 = smul.addr %s244, 8
      %s246 = scalar_lea.vmem %s3, %s245
      %p247 = scmp.eq.s32.totalorder %s21, 0
      // Predicated region
      $region33: #{_fixed_patch_embed_impl.1} parent=31 // pred_check
        %p248 = pneg %p247
      $region34: #{_fixed_patch_embed_impl.1} parent=31 // pred_check_branch
        %250 = sbr.rel (%p248) target = $region36
      $region35: #{_fixed_patch_embed_impl.1} parent=31 // pred_region
        %vm251 = vcmask 31744
        %252 = vst.msk [vmem:[#allocation2] sm:$0xff] %vm251, 0.0
        %253 = vst.msk [vmem:[#allocation2 + $0x8] sm:$0xff] %vm251, 0.0
        %254 = vst.msk [vmem:[#allocation2 + $0x10] sm:$0xff] %vm251, 0.0
        %255 = vst.msk [vmem:[#allocation2 + $0x18] sm:$0xff] %vm251, 0.0
      $region36: #{_fixed_patch_embed_impl.1} parent=31 // pred_fallthru
        _
      %v256 = vld [vmem:[#allocation2] sm:$0xff]
      %v257 = vld [vmem:[#allocation2 + $0x8] sm:$0xff]
      %v258 = vld [vmem:[#allocation2 + $0x10] sm:$0xff]
      %v259 = vld [vmem:[#allocation2 + $0x18] sm:$0xff]
      %v260 = vld [vmem:[%s237] sm:$0xff]
      %v261 = vld [vmem:[%s237 + $0x8] sm:$0xff]
      %v262 = vld [vmem:[%s237 + $0x10] sm:$0xff]
      %v263 = vld [vmem:[%s237 + $0x18] sm:$0xff]
      %v264 = vld [vmem:[%s231] sm:$0xf]
      %v265 = vld [vmem:[%s231 + $0x4] sm:$0xf]
      %v266 = vld [vmem:[%s231 + $0x8] sm:$0xf]
      %v267 = vld [vmem:[%s231 + $0xc] sm:$0xf]
      %v268 = vld [vmem:[%s231 + $0x10] sm:$0xf]
      %v269 = vld [vmem:[%s231 + $0x14] sm:$0xf]
      %v270 = vld [vmem:[%s231 + $0x18] sm:$0xf]
      %v271 = vld [vmem:[%s231 + $0x1c] sm:$0xf]
      %v272 = vld [vmem:[%s231 + $0x20] sm:$0xf]
      %v273 = vld [vmem:[%s231 + $0x24] sm:$0xf]
      %v274 = vld [vmem:[%s231 + $0x28] sm:$0xf]
      %v275 = vld [vmem:[%s231 + $0x2c] sm:$0xf]
      %v276 = vld [vmem:[%s231 + $0x30] sm:$0xf]
      %v277 = vld [vmem:[%s231 + $0x34] sm:$0xf]
      %v278 = vld [vmem:[%s231 + $0x38] sm:$0xf]
      %v279 = vld [vmem:[%s231 + $0x3c] sm:$0xf]
      %v280 = vld [vmem:[%s231 + $0x40] sm:$0xf]
      %v281 = vld [vmem:[%s231 + $0x44] sm:$0xf]
      %v282 = vld [vmem:[%s231 + $0x48] sm:$0xf]
      %v283 = vld [vmem:[%s231 + $0x4c] sm:$0xf]
      %v284 = vld [vmem:[%s231 + $0x50] sm:$0xf]
      %v285 = vld [vmem:[%s231 + $0x54] sm:$0xf]
      %v286 = vld [vmem:[%s231 + $0x58] sm:$0xf]
      %v287 = vld [vmem:[%s231 + $0x5c] sm:$0xf]
      %v288 = vld [vmem:[%s231 + $0x60] sm:$0xf]
      %v289 = vld [vmem:[%s231 + $0x64] sm:$0xf]
      %v290 = vld [vmem:[%s231 + $0x68] sm:$0xf]
      %v291 = vld [vmem:[%s231 + $0x6c] sm:$0xf]
      %v292 = vld [vmem:[%s231 + $0x70] sm:$0xf]
      %v293 = vld [vmem:[%s231 + $0x74] sm:$0xf]
      %v294 = vld [vmem:[%s231 + $0x78] sm:$0xf]
      %v295 = vld [vmem:[%s231 + $0x7c] sm:$0xf]
      %v300 = vunpack.c.l.b16 %v260
      %v301 = vunpack.c.h.b16 %v260
      %v302 = vunpack.c.l.b16 %v261
      %v303 = vunpack.c.h.b16 %v261
      %v304 = vunpack.c.l.b16 %v262
      %v305 = vunpack.c.h.b16 %v262
      %v306 = vunpack.c.l.b16 %v263
      %v307 = vunpack.c.h.b16 %v263
      %v308 = vpack.c.b16 %v302, %v300
      %v309 = vpack.c.b16 %v303, %v301
      %v310 = vpack.c.b16 %v306, %v304
      %v311 = vpack.c.b16 %v307, %v305
      %v348 = vunpack.c.l.b16 %v264
      %v349 = vunpack.c.l.b16 %v265
      %v350 = vunpack.c.l.b16 %v266
      %v351 = vunpack.c.l.b16 %v267
      %v352 = vunpack.c.l.b16 %v268
      %v353 = vunpack.c.l.b16 %v269
      %v354 = vunpack.c.l.b16 %v270
      %v355 = vunpack.c.l.b16 %v271
      %v356 = vunpack.c.l.b16 %v272
      %v357 = vunpack.c.l.b16 %v273
      %v358 = vunpack.c.l.b16 %v274
      %v359 = vunpack.c.l.b16 %v275
      %v360 = vunpack.c.l.b16 %v276
      %v361 = vunpack.c.l.b16 %v277
      %v362 = vunpack.c.l.b16 %v278
      %v363 = vunpack.c.l.b16 %v279
      %v364 = vunpack.c.l.b16 %v280
      %v365 = vunpack.c.l.b16 %v281
      %v366 = vunpack.c.l.b16 %v282
      %v367 = vunpack.c.l.b16 %v283
      %v368 = vunpack.c.l.b16 %v284
      %v369 = vunpack.c.l.b16 %v285
      %v370 = vunpack.c.l.b16 %v286
      %v371 = vunpack.c.l.b16 %v287
      %v372 = vunpack.c.l.b16 %v288
      %v373 = vunpack.c.l.b16 %v289
      %v374 = vunpack.c.l.b16 %v290
      %v375 = vunpack.c.l.b16 %v291
      %v376 = vunpack.c.l.b16 %v292
      %v377 = vunpack.c.l.b16 %v293
      %v378 = vunpack.c.l.b16 %v294
      %v379 = vunpack.c.l.b16 %v295
      %v380 = vpack.c.b16 %v349, %v348
      %v381 = vpack.c.b16 %v351, %v350
      %v382 = vpack.c.b16 %v353, %v352
      %v383 = vpack.c.b16 %v355, %v354
      %v384 = vpack.c.b16 %v357, %v356
      %v385 = vpack.c.b16 %v359, %v358
      %v386 = vpack.c.b16 %v361, %v360
      %v387 = vpack.c.b16 %v363, %v362
      %v388 = vpack.c.b16 %v365, %v364
      %v389 = vpack.c.b16 %v367, %v366
      %v390 = vpack.c.b16 %v369, %v368
      %v391 = vpack.c.b16 %v371, %v370
      %v392 = vpack.c.b16 %v373, %v372
      %v393 = vpack.c.b16 %v375, %v374
      %v394 = vpack.c.b16 %v377, %v376
      %v395 = vpack.c.b16 %v379, %v378
      %412 = vmatpush.bf16.msra.mxu0 %v387
      %413 = vmatpush.bf16.msra.mxu0 %v386
      %414 = vmatpush.bf16.msra.mxu0 %v385
      %415 = vmatpush.bf16.msra.mxu0 %v384
      %416 = vmatpush.bf16.msra.mxu0 %v383
      %417 = vmatpush.bf16.msra.mxu0 %v382
      %418 = vmatpush.bf16.msra.mxu0 %v381
      %419 = vmatpush.bf16.msra.mxu0 %v380
      %420 = vmatmul.bf16.gmra.mxu0 %v308
      %v421 = vpop.f32.mrf.mxu0
      %v422 = vadd.f32 0.0, %v421
      %v423 = vpop.f32.mrf.mxu0
      %v424 = vadd.f32 0.0, %v423
      %425 = vmatmul.bf16.gmra.mxu0 %v310
      %v426 = vpop.f32.mrf.mxu0
      %v427 = vadd.f32 0.0, %v426
      %v428 = vpop.f32.mrf.mxu0
      %v429 = vadd.f32 0.0, %v428
      %430 = vdwg.mxu0
      %431 = vmatpush.bf16.msra.mxu0 %v395
      %432 = vmatpush.bf16.msra.mxu0 %v394
      %433 = vmatpush.bf16.msra.mxu0 %v393
      %434 = vmatpush.bf16.msra.mxu0 %v392
      %435 = vmatpush.bf16.msra.mxu0 %v391
      %436 = vmatpush.bf16.msra.mxu0 %v390
      %437 = vmatpush.bf16.msra.mxu0 %v389
      %438 = vmatpush.bf16.msra.mxu0 %v388
      %439 = vmatmul.bf16.gmra.mxu0 %v309
      %v440 = vpop.f32.mrf.mxu0
      %v441 = vadd.f32 %v422, %v440
      %v442 = vpop.f32.mrf.mxu0
      %v443 = vadd.f32 %v424, %v442
      %444 = vmatmul.bf16.gmra.mxu0 %v311
      %v445 = vpop.f32.mrf.mxu0
      %v446 = vadd.f32 %v427, %v445
      %v447 = vpop.f32.mrf.mxu0
      %v448 = vadd.f32 %v429, %v447
      %449 = vdwg.mxu0
      %v450 = vadd.f32 %v256, %v441
      %v451 = vadd.f32 %v257, %v443
      %v452 = vadd.f32 %v258, %v446
      %v453 = vadd.f32 %v259, %v448
      %vm454 = vcmask 31744
      %455 = vst.msk [vmem:[#allocation2] sm:$0xff] %vm454, %v450
      %456 = vst.msk [vmem:[#allocation2 + $0x8] sm:$0xff] %vm454, %v451
      %457 = vst.msk [vmem:[#allocation2 + $0x10] sm:$0xff] %vm454, %v452
      %458 = vst.msk [vmem:[#allocation2 + $0x18] sm:$0xff] %vm454, %v453
      // Predicated region
      $region37: #{_fixed_patch_embed_impl.1} parent=31 // pred_check
        %p459 = pneg %p247
      $region38: #{_fixed_patch_embed_impl.1} parent=31 // pred_check_branch
        %461 = sbr.rel (%p459) target = $region40
      $region39: #{_fixed_patch_embed_impl.1} parent=31 // pred_region
        %v462 = vld [vmem:[%s2] sm:$0xff]
        %v463 = vld [vmem:[%s2 + $0x8] sm:$0xff]
        %v464 = vld [vmem:[%s2 + $0x10] sm:$0xff]
        %v465 = vld [vmem:[%s2 + $0x18] sm:$0xff]
        %v466 = vld [vmem:[#allocation2] sm:$0xff]
        %v467 = vld [vmem:[#allocation2 + $0x8] sm:$0xff]
        %v468 = vld [vmem:[#allocation2 + $0x10] sm:$0xff]
        %v469 = vld [vmem:[#allocation2 + $0x18] sm:$0xff]
        %471 = vset.pattern.permute.xlu0 0
        %472 = vperm.xlu0 %471, %v462
        %v473 = vpop.permute.xlu0 %472
        %476 = vset.pattern.permute.xlu0 0
        %477 = vperm.xlu0 %476, %v463
        %v478 = vpop.permute.xlu0 %477
        %481 = vset.pattern.permute.xlu0 0
        %482 = vperm.xlu0 %481, %v464
        %v483 = vpop.permute.xlu0 %482
        %486 = vset.pattern.permute.xlu0 0
        %487 = vperm.xlu0 %486, %v465
        %v488 = vpop.permute.xlu0 %487
        %v490 = vadd.f32 %v466, %v473
        %v491 = vadd.f32 %v467, %v478
        %v492 = vadd.f32 %v468, %v483
        %v493 = vadd.f32 %v469, %v488
        %v494 = vsel %vm454, %v490, 0.0
        %v495 = vsel %vm454, %v491, 0.0
        %v496 = vadd.f32 %v494, %v495
        %v497 = vsel %vm454, %v492, 0.0
        %v498 = vadd.f32 %v496, %v497
        %v499 = vsel %vm454, %v493, 0.0
        %v500 = vadd.f32 %v498, %v499
        %v501 = vrot.slane %v500, 4
        %v502 = vadd.f32 %v500, %v501
        %v503 = vrot.slane %v502, 2
        %v504 = vadd.f32 %v502, %v503
        %v505 = vrot.slane %v504, 1
        %v506 = vadd.f32 %v504, %v505
        %v507 = vmul.f32 %v506, 0.03125
        %v508 = vsub.f32 %v490, %v507
        %v509 = vsub.f32 %v491, %v507
        %v510 = vsub.f32 %v492, %v507
        %v511 = vsub.f32 %v493, %v507
        %v512 = vmul.f32 %v508, %v508
        %v513 = vmul.f32 %v509, %v509
        %v514 = vmul.f32 %v510, %v510
        %v515 = vmul.f32 %v511, %v511
        %v516 = vsel %vm454, %v512, 0.0
        %v517 = vsel %vm454, %v513, 0.0
        %v518 = vadd.f32 %v516, %v517
        %v519 = vsel %vm454, %v514, 0.0
        %v520 = vadd.f32 %v518, %v519
        %v521 = vsel %vm454, %v515, 0.0
        %v522 = vadd.f32 %v520, %v521
        %v523 = vrot.slane %v522, 4
        %v524 = vadd.f32 %v522, %v523
        %v525 = vrot.slane %v524, 2
        %v526 = vadd.f32 %v524, %v525
        %v527 = vrot.slane %v526, 1
        %v528 = vadd.f32 %v526, %v527
        %v529 = vmul.f32 %v507, 0.0
        %v530 = vmul.f32 %v529, %v507
        %v531 = vsub.f32 %v528, %v530
        %v532 = vmul.f32 %v531, 0.03125
        %v533 = vmax.f32 %v532, 0.0
        %v534 = vadd.f32 %v533, 1e-05
        %v535 = vrsqrt.pop %v534
        %v536 = vmul.f32 %v535, %v534
        %v537 = vmul.f32 %v536, %v535
        %v538 = vmul.f32 0.5, %v537
        %v539 = vsub.f32 1.5, %v538
        %v540 = vmul.f32 %v535, %v539
        %vm541 = vweird.f32 %v534
        %vm542 = vweird.f32 %v535
        %vm543 = vmor %vm541, %vm542
        %v544 = vsel %vm543, %v535, %v540
        %v545 = vmul.f32 %v508, %v544
        %v546 = vmul.f32 %v509, %v544
        %v547 = vmul.f32 %v510, %v544
        %v548 = vmul.f32 %v511, %v544
        %549 = vset.pattern.permute.xlu0 1
        %550 = vperm.xlu0 %549, %v462
        %v551 = vpop.permute.xlu0 %550
        %553 = vset.pattern.permute.xlu0 1
        %554 = vperm.xlu0 %553, %v463
        %v555 = vpop.permute.xlu0 %554
        %557 = vset.pattern.permute.xlu0 1
        %558 = vperm.xlu0 %557, %v464
        %v559 = vpop.permute.xlu0 %558
        %561 = vset.pattern.permute.xlu0 1
        %562 = vperm.xlu0 %561, %v465
        %v563 = vpop.permute.xlu0 %562
        %v565 = vmul.f32 %v545, %v551
        %v566 = vmul.f32 %v546, %v555
        %v567 = vmul.f32 %v547, %v559
        %v568 = vmul.f32 %v548, %v563
        %569 = vset.pattern.permute.xlu0 2
        %570 = vperm.xlu0 %569, %v462
        %v571 = vpop.permute.xlu0 %570
        %573 = vset.pattern.permute.xlu0 2
        %574 = vperm.xlu0 %573, %v463
        %v575 = vpop.permute.xlu0 %574
        %577 = vset.pattern.permute.xlu0 2
        %578 = vperm.xlu0 %577, %v464
        %v579 = vpop.permute.xlu0 %578
        %581 = vset.pattern.permute.xlu0 2
        %582 = vperm.xlu0 %581, %v465
        %v583 = vpop.permute.xlu0 %582
        %v585 = vadd.f32 %v565, %v571
        %v586 = vadd.f32 %v566, %v575
        %v587 = vadd.f32 %v567, %v579
        %v588 = vadd.f32 %v568, %v583
        %589 = vst.msk [vmem:[%s246] sm:$0xff] %vm454, %v585
        %590 = vst.msk [vmem:[%s246 + $0x8] sm:$0xff] %vm454, %v586
        %591 = vst.msk [vmem:[%s246 + $0x10] sm:$0xff] %vm454, %v587
        %592 = vst.msk [vmem:[%s246 + $0x18] sm:$0xff] %vm454, %v588
      $region40: #{_fixed_patch_embed_impl.1} parent=31 // pred_fallthru
        _
      %p593 = scmp.lt.s32.totalorder %s19, 1
      %s594 = scalar_select %p593, %s19, 1
      %p595 = scmp.lt.s32.totalorder %s20, 0
      %s596 = scalar_select %p595, %s20, 0
      %s597 = smul.addr %s594, 4
      %s598 = sadd.s32 %s596, %s597
      %s599 = smul.addr %s598, 8
      %s600 = scalar_lea.vmem %s3, %s599
      // Predicated region
      $region41: #{_fixed_patch_embed_impl.1} parent=31 // pred_check
        %p601 = pneg %p130
      $region42: #{_fixed_patch_embed_impl.1} parent=31 // pred_check_branch
        %603 = sbr.rel (%p601) target = $region44
      $region43: #{_fixed_patch_embed_impl.1} parent=31 // pred_region
        _
      $region44: #{_fixed_patch_embed_impl.1} parent=31 // pred_fallthru
        _
    $region32: #{_fixed_patch_embed_impl.1} parent=5 // pred_fallthru
      _
    %p604 = scmp.le.s32.totalorder 2, %s9
    // Predicated region
    $region45: #{_fixed_patch_embed_impl.1} parent=5 // pred_check
      %p605 = pneg %p604
    $region46: #{_fixed_patch_embed_impl.1} parent=5 // pred_check_branch
      %607 = sbr.rel (%p605) target = $region48
    $region47: #{_fixed_patch_embed_impl.1} parent=5 // pred_region
      %s608 = ssub.s32 %s9, 2
      // Predicated region
      $region49: #{_fixed_patch_embed_impl.1} parent=47 // pred_check
        %p609 = pneg %p136
      $region50: #{_fixed_patch_embed_impl.1} parent=47 // pred_check_branch
        %611 = sbr.rel (%p609) target = $region52
      $region51: #{_fixed_patch_embed_impl.1} parent=47 // pred_region
        %p612 = scmp.lt.s32.totalorder %s22, 1
        %s613 = scalar_select %p612, %s22, 1
        %p614 = scmp.lt.s32.totalorder %s23, 0
        %s615 = scalar_select %p614, %s23, 0
        %s616 = smul.addr %s613, 4
        %s617 = sadd.s32 %s615, %s616
        %s618 = smul.addr %s617, 8
        %s619 = scalar_lea.vmem %s3, %s618
      $region52: #{_fixed_patch_embed_impl.1} parent=47 // pred_fallthru
        _
    $region48: #{_fixed_patch_embed_impl.1} parent=5 // pred_fallthru
      _
  $region6: #{_fixed_patch_embed_impl.1} parent=0 // loop_footer
    %s13 = sadd.s32 1, %s9
  $region7: #{_fixed_patch_embed_impl.1} parent=0 // loop_footer_branch
    %8 = sbr.rel target = $region3
  $region8: #{_fixed_patch_embed_impl.1} parent=0 // loop_exit
    _

// kernel: _fixed_patch_embed_impl.1
$region0: #{_fixed_patch_embed_impl.1}
  #allocation0 [shape = 'u32[]', space=smem, size = 0x4, offset = 0x4, fixed_abs, tag = 'smem constant byte address 0x4 - core index']
  #allocation1 [shape = 'u32[72,128]{1,0:T(1,128)}', space=vmem, size = 0x9000, scoped, tag = 'internal scratch']
  #allocation2 [shape = 'f32[32,4]{1,0:T(8,128)}', space=vmem, size = 0x4000, scoped, tag = 'scratch operand']
  %s0 = inlined_call_operand.vmem [shape: bf16[2,256,4], index: 0, kind: input, shape index: {}]
  %s1 = inlined_call_operand.vmem [shape: bf16[32,256], index: 1, kind: input, shape index: {}]
  %s2 = inlined_call_operand.vmem [shape: f32[32,8], index: 2, kind: input, shape index: {}]
  %s3 = inlined_call_operand.vmem [shape: f32[2,32,4], index: 3, kind: output, shape index: {}]
  %s4 = sld [smem:[#allocation0]]
  $region53: #{_fixed_patch_embed_impl.1} parent=0
    _
  %s6 = ssub.s32 1, %s4
  %s7 = scalar_select 0, %s6, %s4
  loop: start=0, step=1, limit=4
  $region2: #{_fixed_patch_embed_impl.1} parent=0 // loop_pre_header
    _
  $region3: #{_fixed_patch_embed_impl.1} parent=0 // loop_header
    %s9 = sphi 0, %s13
    %p10 = scmp.ge.s32.totalorder %s9, 4
    %s16 = sphi 0, %s35
    %s17 = sphi 0, %s31
    %s18 = sphi 0, %s27
    %s19 = sphi 0, %s16
    %s20 = sphi 0, %s17
    %s21 = sphi 0, %s18
    %s22 = sphi 0, %s19
    %s23 = sphi 0, %s20
    %s24 = sphi 0, %s21
    %s42 = sphi 0, %s44
    %s45 = sphi 0, %s42
    %s46 = sphi 0, %s45
    %s62 = sphi 0, %s46
    %s68 = sphi 0, %s70
    %s71 = sphi 0, %s68
    %s72 = sphi 0, %s71
    %s88 = sphi 0, %s72
    %s92 = sphi 0, %s92
    %s94 = sphi 0, %s92
    %s95 = sphi 0, %s94
    %s109 = sphi 0, %s95
    %s117 = sphi 0, %s119
    %s120 = sphi 0, %s117
    %s121 = sphi 0, %s120
    %s137 = sphi 0, %s121
  $region4: #{_fixed_patch_embed_impl.1} parent=0 // loop_header_branch
    %12 = sbr.rel (%p10) target = $region8
  $region5: #{_fixed_patch_embed_impl.1} parent=0 // loop_body
    %s14 = ssub.s32 %s9, 1
    %s15 = ssub.s32 %s9, 2
    %s25 = sadd.s32 1, %s18
    %p26 = scmp.ge.s32.totalorder %s25, 1
    %s27 = scalar_select %p26, 0, %s25
    %s28 = sadd.s32 1, %s17
    %s29 = scalar_select %p26, %s28, %s17
    %p30 = scmp.ge.s32.totalorder %s29, 1
    %s31 = scalar_select %p30, 0, %s29
    %s32 = sadd.s32 1, %s16
    %s33 = scalar_select %p30, %s32, %s16
    %p34 = scmp.ge.s32.totalorder %s33, 2
    %s35 = scalar_select %p34, 0, %s33
    %s36 = ssub.s32 %s16, %s35
    %s37 = ssub.s32 %s18, %s27
    %s38 = sor.u32 %s36, %s37
    %s39 = ssub.s32 %s17, %s31
    %s40 = sor.u32 %s38, %s39
    %p41 = scmp.eq.s32.totalorder %s40, 0
    %s43 = sadd.s32 %s42, 1
    %s44 = scalar_select %p41, %s42, %s43
    %p47 = pneg %p41
    %p48 = scmp.eq.s32.totalorder %s9, 1
    %p49 = por %p47, %p48
    %p50 = scmp.ne.s32.totalorder %s42, %s45
    %p51 = scmp.eq.s32.totalorder %s9, 0
    %p52 = por %p50, %p51
    %p53 = scmp.ne.s32.totalorder %s42, %s45
    %p54 = scmp.eq.s32.totalorder %s14, 1
    %p55 = por %p53, %p54
    %p56 = scmp.ne.s32.totalorder %s45, %s46
    %p57 = scmp.eq.s32.totalorder %s14, 0
    %p58 = por %p56, %p57
    %p59 = scmp.ne.s32.totalorder %s45, %s46
    %p60 = scmp.eq.s32.totalorder %s15, 1
    %p61 = por %p59, %p60
    %p63 = scmp.ne.s32.totalorder %s46, %s62
    %p64 = scmp.eq.s32.totalorder %s15, 0
    %p65 = por %p63, %p64
    %s66 = ssub.s32 %s18, %s27
    %p67 = scmp.eq.s32.totalorder %s66, 0
    %s69 = sadd.s32 %s68, 1
    %s70 = scalar_select %p67, %s68, %s69
    %p73 = pneg %p67
    %p74 = scmp.eq.s32.totalorder %s9, 1
    %p75 = por %p73, %p74
    %p76 = scmp.ne.s32.totalorder %s68, %s71
    %p77 = scmp.eq.s32.totalorder %s9, 0
    %p78 = por %p76, %p77
    %p79 = scmp.ne.s32.totalorder %s68, %s71
    %p80 = scmp.eq.s32.totalorder %s14, 1
    %p81 = por %p79, %p80
    %p82 = scmp.ne.s32.totalorder %s71, %s72
    %p83 = scmp.eq.s32.totalorder %s14, 0
    %p84 = por %p82, %p83
    %p85 = scmp.ne.s32.totalorder %s71, %s72
    %p86 = scmp.eq.s32.totalorder %s15, 1
    %p87 = por %p85, %p86
    %p89 = scmp.ne.s32.totalorder %s72, %s88
    %p90 = scmp.eq.s32.totalorder %s15, 0
    %p91 = por %p89, %p90
    %s93 = sadd.s32 %s92, 1
    %p96 = scmp.eq.s32.totalorder %s9, 1
    %p97 = scmp.ne.s32.totalorder %s92, %s94
    %p98 = scmp.eq.s32.totalorder %s9, 0
    %p99 = por %p97, %p98
    %p100 = scmp.ne.s32.totalorder %s92, %s94
    %p101 = scmp.eq.s32.totalorder %s14, 1
    %p102 = por %p100, %p101
    %p103 = scmp.ne.s32.totalorder %s94, %s95
    %p104 = scmp.eq.s32.totalorder %s14, 0
    %p105 = por %p103, %p104
    %p106 = scmp.ne.s32.totalorder %s94, %s95
    %p107 = scmp.eq.s32.totalorder %s15, 1
    %p108 = por %p106, %p107
    %p110 = scmp.ne.s32.totalorder %s95, %s109
    %p111 = scmp.eq.s32.totalorder %s15, 0
    %p112 = por %p110, %p111
    %s113 = ssub.s32 %s16, %s35
    %s114 = ssub.s32 %s17, %s31
    %s115 = sor.u32 %s113, %s114
    %p116 = scmp.eq.s32.totalorder %s115, 0
    %s118 = sadd.s32 %s117, 1
    %s119 = scalar_select %p116, %s117, %s118
    %p122 = pneg %p116
    %p123 = scmp.eq.s32.totalorder %s9, 1
    %p124 = por %p122, %p123
    %p125 = scmp.ne.s32.totalorder %s117, %s120
    %p126 = scmp.eq.s32.totalorder %s9, 0
    %p127 = por %p125, %p126
    %p128 = scmp.ne.s32.totalorder %s117, %s120
    %p129 = scmp.eq.s32.totalorder %s14, 1
    %p130 = por %p128, %p129
    %p131 = scmp.ne.s32.totalorder %s120, %s121
    %p132 = scmp.eq.s32.totalorder %s14, 0
    %p133 = por %p131, %p132
    %p134 = scmp.ne.s32.totalorder %s120, %s121
    %p135 = scmp.eq.s32.totalorder %s15, 1
    %p136 = por %p134, %p135
    %p138 = scmp.ne.s32.totalorder %s121, %s137
    %p139 = scmp.eq.s32.totalorder %s15, 0
    %p140 = por %p138, %p139
    %p141 = scmp.le.s32.totalorder 1, %s9
    %p142 = scmp.lt.s32.totalorder %s9, 3
    %p143 = pnand %p141, %p142
    %p144 = pneg %p143
    // Predicated region
    $region9: #{_fixed_patch_embed_impl.1} parent=5 // pred_check
      _
    $region10: #{_fixed_patch_embed_impl.1} parent=5 // pred_check_branch
      %146 = sbr.rel (%p143) target = $region12
    $region11: #{_fixed_patch_embed_impl.1} parent=5 // pred_region
      %s147 = ssub.s32 %s9, 1
      // Predicated region
      $region13: #{_fixed_patch_embed_impl.1} parent=11 // pred_check
        %p148 = pneg %p84
      $region14: #{_fixed_patch_embed_impl.1} parent=11 // pred_check_branch
        %150 = sbr.rel (%p148) target = $region16
      $region15: #{_fixed_patch_embed_impl.1} parent=11 // pred_region
        %s151 = smul.u32 2, %s21
        %p152 = scmp.lt.s32.totalorder %s151, 1
        %s153 = scalar_select %p152, %s151, 1
        %s154 = smul.addr %s153, 4
        %s155 = scalar_lea.vmem %s1, %s154
        %s156 = smul.u32 2, %s21
      $region16: #{_fixed_patch_embed_impl.1} parent=11 // pred_fallthru
        _
      // Predicated region
      $region17: #{_fixed_patch_embed_impl.1} parent=11 // pred_check
        %p157 = pneg %p105
      $region18: #{_fixed_patch_embed_impl.1} parent=11 // pred_check_branch
        %159 = sbr.rel (%p157) target = $region20
      $region19: #{_fixed_patch_embed_impl.1} parent=11 // pred_region
        _
      $region20: #{_fixed_patch_embed_impl.1} parent=11 // pred_fallthru
        _
    $region12: #{_fixed_patch_embed_impl.1} parent=5 // pred_fallthru
      _
    %p160 = scmp.lt.s32.totalorder %s9, 2
    // Predicated region
    $region21: #{_fixed_patch_embed_impl.1} parent=5 // pred_check
      %p161 = pneg %p160
    $region22: #{_fixed_patch_embed_impl.1} parent=5 // pred_check_branch
      %163 = sbr.rel (%p161) target = $region24
    $region23: #{_fixed_patch_embed_impl.1} parent=5 // pred_region
      // Predicated region
      $region25: #{_fixed_patch_embed_impl.1} parent=23 // pred_check
        %p164 = pneg %p52
      $region26: #{_fixed_patch_embed_impl.1} parent=23 // pred_check_branch
        %166 = sbr.rel (%p164) target = $region28
      $region27: #{_fixed_patch_embed_impl.1} parent=23 // pred_region
        %s167 = smul.u32 32, %s18
        %p168 = scmp.lt.s32.totalorder %s16, 1
        %s169 = scalar_select %p168, %s16, 1
        %p170 = scmp.lt.s32.totalorder %s167, 31
        %s171 = scalar_select %p170, %s167, 31
        %p172 = scmp.lt.s32.totalorder %s17, 0
        %s173 = scalar_select %p172, %s17, 0
        %s174 = sadd.s32 %s173, %s171
        %s175 = smul.addr %s169, 32
        %s176 = sadd.s32 %s174, %s175
        %s177 = smul.addr %s176, 4
        %s178 = scalar_lea.vmem %s0, %s177
        %s179 = smul.u32 32, %s18
      $region28: #{_fixed_patch_embed_impl.1} parent=23 // pred_fallthru
        _
    $region24: #{_fixed_patch_embed_impl.1} parent=5 // pred_fallthru
      _
    %p180 = scmp.le.s32.totalorder 1, %s9
    %p181 = scmp.lt.s32.totalorder %s9, 3
    %p182 = pnand %p180, %p181
    %p183 = pneg %p182
    // Predicated region
    $region29: #{_fixed_patch_embed_impl.1} parent=5 // pred_check
      _
    $region30: #{_fixed_patch_embed_impl.1} parent=5 // pred_check_branch
      %185 = sbr.rel (%p182) target = $region32
    $region31: #{_fixed_patch_embed_impl.1} parent=5 // pred_region
      %s186 = ssub.s32 %s9, 1
      %s187 = smul.u32 32, %s21
      %p188 = scmp.lt.s32.totalorder %s19, 1
      %s189 = scalar_select %p188, %s19, 1
      %p190 = scmp.lt.s32.totalorder %s187, 31
      %s191 = scalar_select %p190, %s187, 31
      %p192 = scmp.lt.s32.totalorder %s20, 0
      %s193 = scalar_select %p192, %s20, 0
      %s194 = sadd.s32 %s193, %s191
      %s195 = smul.addr %s189, 32
      %s196 = sadd.s32 %s194, %s195
      %s197 = smul.addr %s196, 4
      %s198 = scalar_lea.vmem %s0, %s197
      %p199 = pneg %p58
      %p200 = pneg %p55
      %s201 = smul.u32 2, %s21
      %p202 = scmp.lt.s32.totalorder %s201, 1
      %s203 = scalar_select %p202, %s201, 1
      %s204 = smul.addr %s203, 4
      %s205 = scalar_lea.vmem %s1, %s204
      %p206 = pneg %p84
      %p207 = pneg %p81
      %p208 = pneg %p105
      %p209 = pneg %p102
      %p210 = pneg %p133
      %p211 = pneg %p130
      %p212 = scmp.lt.s32.totalorder %s19, 1
      %s213 = scalar_select %p212, %s19, 1
      %p214 = scmp.lt.s32.totalorder %s20, 0
      %s215 = scalar_select %p214, %s20, 0
      %s216 = smul.addr %s213, 4
      %s217 = sadd.s32 %s215, %s216
      %s218 = smul.addr %s217, 8
      %s219 = scalar_lea.vmem %s3, %s218
      %s220 = smul.u32 32, %s21
      %p221 = scmp.lt.s32.totalorder %s19, 1
      %s222 = scalar_select %p221, %s19, 1
      %p223 = scmp.lt.s32.totalorder %s220, 31
      %s224 = scalar_select %p223, %s220, 31
      %p225 = scmp.lt.s32.totalorder %s20, 0
      %s226 = scalar_select %p225, %s20, 0
      %s227 = sadd.s32 %s226, %s224
      %s228 = smul.addr %s222, 32
      %s229 = sadd.s32 %s227, %s228
      %s230 = smul.addr %s229, 4
      %s231 = scalar_lea.vmem %s0, %s230
      %s232 = smul.u32 32, %s21
      %s233 = smul.u32 2, %s21
      %p234 = scmp.lt.s32.totalorder %s233, 1
      %s235 = scalar_select %p234, %s233, 1
      %s236 = smul.addr %s235, 4
      %s237 = scalar_lea.vmem %s1, %s236
      %s238 = smul.u32 2, %s21
      %p239 = scmp.lt.s32.totalorder %s19, 1
      %s240 = scalar_select %p239, %s19, 1
      %p241 = scmp.lt.s32.totalorder %s20, 0
      %s242 = scalar_select %p241, %s20, 0
      %s243 = smul.addr %s240, 4
      %s244 = sadd.s32 %s242, %s243
      %s245 = smul.addr %s244, 8
      %s246 = scalar_lea.vmem %s3, %s245
      %p247 = scmp.eq.s32.totalorder %s21, 0
      // Predicated region
      $region33: #{_fixed_patch_embed_impl.1} parent=31 // pred_check
        %p248 = pneg %p247
      $region34: #{_fixed_patch_embed_impl.1} parent=31 // pred_check_branch
        %250 = sbr.rel (%p248) target = $region36
      $region35: #{_fixed_patch_embed_impl.1} parent=31 // pred_region
        %vm251 = vcmask 31744
        %252 = vst.msk [vmem:[#allocation2] sm:$0xff] %vm251, 0.0
        %253 = vst.msk [vmem:[#allocation2 + $0x8] sm:$0xff] %vm251, 0.0
        %254 = vst.msk [vmem:[#allocation2 + $0x10] sm:$0xff] %vm251, 0.0
        %255 = vst.msk [vmem:[#allocation2 + $0x18] sm:$0xff] %vm251, 0.0
      $region36: #{_fixed_patch_embed_impl.1} parent=31 // pred_fallthru
        _
      %v256 = vld [vmem:[#allocation2] sm:$0xff]
      %v257 = vld [vmem:[#allocation2 + $0x8] sm:$0xff]
      %v258 = vld [vmem:[#allocation2 + $0x10] sm:$0xff]
      %v259 = vld [vmem:[#allocation2 + $0x18] sm:$0xff]
      %v260 = vld [vmem:[%s237] sm:$0xff]
      %v261 = vld [vmem:[%s237 + $0x8] sm:$0xff]
      %v262 = vld [vmem:[%s237 + $0x10] sm:$0xff]
      %v263 = vld [vmem:[%s237 + $0x18] sm:$0xff]
      %v264 = vld [vmem:[%s231] sm:$0xf]
      %v265 = vld [vmem:[%s231 + $0x4] sm:$0xf]
      %v266 = vld [vmem:[%s231 + $0x8] sm:$0xf]
      %v267 = vld [vmem:[%s231 + $0xc] sm:$0xf]
      %v268 = vld [vmem:[%s231 + $0x10] sm:$0xf]
      %v269 = vld [vmem:[%s231 + $0x14] sm:$0xf]
      %v270 = vld [vmem:[%s231 + $0x18] sm:$0xf]
      %v271 = vld [vmem:[%s231 + $0x1c] sm:$0xf]
      %v272 = vld [vmem:[%s231 + $0x20] sm:$0xf]
      %v273 = vld [vmem:[%s231 + $0x24] sm:$0xf]
      %v274 = vld [vmem:[%s231 + $0x28] sm:$0xf]
      %v275 = vld [vmem:[%s231 + $0x2c] sm:$0xf]
      %v276 = vld [vmem:[%s231 + $0x30] sm:$0xf]
      %v277 = vld [vmem:[%s231 + $0x34] sm:$0xf]
      %v278 = vld [vmem:[%s231 + $0x38] sm:$0xf]
      %v279 = vld [vmem:[%s231 + $0x3c] sm:$0xf]
      %v280 = vld [vmem:[%s231 + $0x40] sm:$0xf]
      %v281 = vld [vmem:[%s231 + $0x44] sm:$0xf]
      %v282 = vld [vmem:[%s231 + $0x48] sm:$0xf]
      %v283 = vld [vmem:[%s231 + $0x4c] sm:$0xf]
      %v284 = vld [vmem:[%s231 + $0x50] sm:$0xf]
      %v285 = vld [vmem:[%s231 + $0x54] sm:$0xf]
      %v286 = vld [vmem:[%s231 + $0x58] sm:$0xf]
      %v287 = vld [vmem:[%s231 + $0x5c] sm:$0xf]
      %v288 = vld [vmem:[%s231 + $0x60] sm:$0xf]
      %v289 = vld [vmem:[%s231 + $0x64] sm:$0xf]
      %v290 = vld [vmem:[%s231 + $0x68] sm:$0xf]
      %v291 = vld [vmem:[%s231 + $0x6c] sm:$0xf]
      %v292 = vld [vmem:[%s231 + $0x70] sm:$0xf]
      %v293 = vld [vmem:[%s231 + $0x74] sm:$0xf]
      %v294 = vld [vmem:[%s231 + $0x78] sm:$0xf]
      %v295 = vld [vmem:[%s231 + $0x7c] sm:$0xf]
      %v300 = vunpack.c.l.b16 %v260
      %v301 = vunpack.c.h.b16 %v260
      %v302 = vunpack.c.l.b16 %v261
      %v303 = vunpack.c.h.b16 %v261
      %v304 = vunpack.c.l.b16 %v262
      %v305 = vunpack.c.h.b16 %v262
      %v306 = vunpack.c.l.b16 %v263
      %v307 = vunpack.c.h.b16 %v263
      %v308 = vpack.c.b16 %v302, %v300
      %v309 = vpack.c.b16 %v303, %v301
      %v310 = vpack.c.b16 %v306, %v304
      %v311 = vpack.c.b16 %v307, %v305
      %v348 = vunpack.c.l.b16 %v264
      %v349 = vunpack.c.l.b16 %v265
      %v350 = vunpack.c.l.b16 %v266
      %v351 = vunpack.c.l.b16 %v267
      %v352 = vunpack.c.l.b16 %v268
      %v353 = vunpack.c.l.b16 %v269
      %v354 = vunpack.c.l.b16 %v270
      %v355 = vunpack.c.l.b16 %v271
      %v356 = vunpack.c.l.b16 %v272
      %v357 = vunpack.c.l.b16 %v273
      %v358 = vunpack.c.l.b16 %v274
      %v359 = vunpack.c.l.b16 %v275
      %v360 = vunpack.c.l.b16 %v276
      %v361 = vunpack.c.l.b16 %v277
      %v362 = vunpack.c.l.b16 %v278
      %v363 = vunpack.c.l.b16 %v279
      %v364 = vunpack.c.l.b16 %v280
      %v365 = vunpack.c.l.b16 %v281
      %v366 = vunpack.c.l.b16 %v282
      %v367 = vunpack.c.l.b16 %v283
      %v368 = vunpack.c.l.b16 %v284
      %v369 = vunpack.c.l.b16 %v285
      %v370 = vunpack.c.l.b16 %v286
      %v371 = vunpack.c.l.b16 %v287
      %v372 = vunpack.c.l.b16 %v288
      %v373 = vunpack.c.l.b16 %v289
      %v374 = vunpack.c.l.b16 %v290
      %v375 = vunpack.c.l.b16 %v291
      %v376 = vunpack.c.l.b16 %v292
      %v377 = vunpack.c.l.b16 %v293
      %v378 = vunpack.c.l.b16 %v294
      %v379 = vunpack.c.l.b16 %v295
      %v380 = vpack.c.b16 %v349, %v348
      %v381 = vpack.c.b16 %v351, %v350
      %v382 = vpack.c.b16 %v353, %v352
      %v383 = vpack.c.b16 %v355, %v354
      %v384 = vpack.c.b16 %v357, %v356
      %v385 = vpack.c.b16 %v359, %v358
      %v386 = vpack.c.b16 %v361, %v360
      %v387 = vpack.c.b16 %v363, %v362
      %v388 = vpack.c.b16 %v365, %v364
      %v389 = vpack.c.b16 %v367, %v366
      %v390 = vpack.c.b16 %v369, %v368
      %v391 = vpack.c.b16 %v371, %v370
      %v392 = vpack.c.b16 %v373, %v372
      %v393 = vpack.c.b16 %v375, %v374
      %v394 = vpack.c.b16 %v377, %v376
      %v395 = vpack.c.b16 %v379, %v378
      %412 = vmatpush.bf16.msra.mxu0 %v387
      %413 = vmatpush.bf16.msra.mxu0 %v386
      %414 = vmatpush.bf16.msra.mxu0 %v385
      %415 = vmatpush.bf16.msra.mxu0 %v384
      %416 = vmatpush.bf16.msra.mxu0 %v383
      %417 = vmatpush.bf16.msra.mxu0 %v382
      %418 = vmatpush.bf16.msra.mxu0 %v381
      %419 = vmatpush.bf16.msra.mxu0 %v380
      %420 = vmatmul.bf16.gmra.mxu0 %v308
      %v421 = vpop.f32.mrf.mxu0
      %v422 = vadd.f32 0.0, %v421
      %v423 = vpop.f32.mrf.mxu0
      %v424 = vadd.f32 0.0, %v423
      %425 = vmatmul.bf16.gmra.mxu0 %v310
      %v426 = vpop.f32.mrf.mxu0
      %v427 = vadd.f32 0.0, %v426
      %v428 = vpop.f32.mrf.mxu0
      %v429 = vadd.f32 0.0, %v428
      %430 = vdwg.mxu0
      %431 = vmatpush.bf16.msra.mxu0 %v395
      %432 = vmatpush.bf16.msra.mxu0 %v394
      %433 = vmatpush.bf16.msra.mxu0 %v393
      %434 = vmatpush.bf16.msra.mxu0 %v392
      %435 = vmatpush.bf16.msra.mxu0 %v391
      %436 = vmatpush.bf16.msra.mxu0 %v390
      %437 = vmatpush.bf16.msra.mxu0 %v389
      %438 = vmatpush.bf16.msra.mxu0 %v388
      %439 = vmatmul.bf16.gmra.mxu0 %v309
      %v440 = vpop.f32.mrf.mxu0
      %v441 = vadd.f32 %v422, %v440
      %v442 = vpop.f32.mrf.mxu0
      %v443 = vadd.f32 %v424, %v442
      %444 = vmatmul.bf16.gmra.mxu0 %v311
      %v445 = vpop.f32.mrf.mxu0
      %v446 = vadd.f32 %v427, %v445
      %v447 = vpop.f32.mrf.mxu0
      %v448 = vadd.f32 %v429, %v447
      %449 = vdwg.mxu0
      %v450 = vadd.f32 %v256, %v441
      %v451 = vadd.f32 %v257, %v443
      %v452 = vadd.f32 %v258, %v446
      %v453 = vadd.f32 %v259, %v448
      %vm454 = vcmask 31744
      %455 = vst.msk [vmem:[#allocation2] sm:$0xff] %vm454, %v450
      %456 = vst.msk [vmem:[#allocation2 + $0x8] sm:$0xff] %vm454, %v451
      %457 = vst.msk [vmem:[#allocation2 + $0x10] sm:$0xff] %vm454, %v452
      %458 = vst.msk [vmem:[#allocation2 + $0x18] sm:$0xff] %vm454, %v453
      // Predicated region
      $region37: #{_fixed_patch_embed_impl.1} parent=31 // pred_check
        %p459 = pneg %p247
      $region38: #{_fixed_patch_embed_impl.1} parent=31 // pred_check_branch
        %461 = sbr.rel (%p459) target = $region40
      $region39: #{_fixed_patch_embed_impl.1} parent=31 // pred_region
        %v462 = vld [vmem:[%s2] sm:$0xff]
        %v463 = vld [vmem:[%s2 + $0x8] sm:$0xff]
        %v464 = vld [vmem:[%s2 + $0x10] sm:$0xff]
        %v465 = vld [vmem:[%s2 + $0x18] sm:$0xff]
        %v466 = vld [vmem:[#allocation2] sm:$0xff]
        %v467 = vld [vmem:[#allocation2 + $0x8] sm:$0xff]
        %v468 = vld [vmem:[#allocation2 + $0x10] sm:$0xff]
        %v469 = vld [vmem:[#allocation2 + $0x18] sm:$0xff]
        %471 = vset.pattern.permute.xlu0 0
        %472 = vperm.xlu0 %471, %v462
        %v473 = vpop.permute.xlu0 %472
        %476 = vset.pattern.permute.xlu0 0
        %477 = vperm.xlu0 %476, %v463
        %v478 = vpop.permute.xlu0 %477
        %481 = vset.pattern.permute.xlu0 0
        %482 = vperm.xlu0 %481, %v464
        %v483 = vpop.permute.xlu0 %482
        %486 = vset.pattern.permute.xlu0 0
        %487 = vperm.xlu0 %486, %v465
        %v488 = vpop.permute.xlu0 %487
        %v490 = vadd.f32 %v466, %v473
        %v491 = vadd.f32 %v467, %v478
        %v492 = vadd.f32 %v468, %v483
        %v493 = vadd.f32 %v469, %v488
        %v494 = vsel %vm454, %v490, 0.0
        %v495 = vsel %vm454, %v491, 0.0
        %v496 = vadd.f32 %v494, %v495
        %v497 = vsel %vm454, %v492, 0.0
        %v498 = vadd.f32 %v496, %v497
        %v499 = vsel %vm454, %v493, 0.0
        %v500 = vadd.f32 %v498, %v499
        %v501 = vrot.slane %v500, 4
        %v502 = vadd.f32 %v500, %v501
        %v503 = vrot.slane %v502, 2
        %v504 = vadd.f32 %v502, %v503
        %v505 = vrot.slane %v504, 1
        %v506 = vadd.f32 %v504, %v505
        %v507 = vmul.f32 %v506, 0.03125
        %v508 = vsub.f32 %v490, %v507
        %v509 = vsub.f32 %v491, %v507
        %v510 = vsub.f32 %v492, %v507
        %v511 = vsub.f32 %v493, %v507
        %v512 = vmul.f32 %v508, %v508
        %v513 = vmul.f32 %v509, %v509
        %v514 = vmul.f32 %v510, %v510
        %v515 = vmul.f32 %v511, %v511
        %v516 = vsel %vm454, %v512, 0.0
        %v517 = vsel %vm454, %v513, 0.0
        %v518 = vadd.f32 %v516, %v517
        %v519 = vsel %vm454, %v514, 0.0
        %v520 = vadd.f32 %v518, %v519
        %v521 = vsel %vm454, %v515, 0.0
        %v522 = vadd.f32 %v520, %v521
        %v523 = vrot.slane %v522, 4
        %v524 = vadd.f32 %v522, %v523
        %v525 = vrot.slane %v524, 2
        %v526 = vadd.f32 %v524, %v525
        %v527 = vrot.slane %v526, 1
        %v528 = vadd.f32 %v526, %v527
        %v529 = vmul.f32 %v507, 0.0
        %v530 = vmul.f32 %v529, %v507
        %v531 = vsub.f32 %v528, %v530
        %v532 = vmul.f32 %v531, 0.03125
        %v533 = vmax.f32 %v532, 0.0
        %v534 = vadd.f32 %v533, 1e-05
        %v535 = vrsqrt.pop %v534
        %v536 = vmul.f32 %v535, %v534
        %v537 = vmul.f32 %v536, %v535
        %v538 = vmul.f32 0.5, %v537
        %v539 = vsub.f32 1.5, %v538
        %v540 = vmul.f32 %v535, %v539
        %vm541 = vweird.f32 %v534
        %vm542 = vweird.f32 %v535
        %vm543 = vmor %vm541, %vm542
        %v544 = vsel %vm543, %v535, %v540
        %v545 = vmul.f32 %v508, %v544
        %v546 = vmul.f32 %v509, %v544
        %v547 = vmul.f32 %v510, %v544
        %v548 = vmul.f32 %v511, %v544
        %549 = vset.pattern.permute.xlu0 1
        %550 = vperm.xlu0 %549, %v462
        %v551 = vpop.permute.xlu0 %550
        %553 = vset.pattern.permute.xlu0 1
        %554 = vperm.xlu0 %553, %v463
        %v555 = vpop.permute.xlu0 %554
        %557 = vset.pattern.permute.xlu0 1
        %558 = vperm.xlu0 %557, %v464
        %v559 = vpop.permute.xlu0 %558
        %561 = vset.pattern.permute.xlu0 1
        %562 = vperm.xlu0 %561, %v465
        %v563 = vpop.permute.xlu0 %562
        %v565 = vmul.f32 %v545, %v551
        %v566 = vmul.f32 %v546, %v555
        %v567 = vmul.f32 %v547, %v559
        %v568 = vmul.f32 %v548, %v563
        %569 = vset.pattern.permute.xlu0 2
        %570 = vperm.xlu0 %569, %v462
        %v571 = vpop.permute.xlu0 %570
        %573 = vset.pattern.permute.xlu0 2
        %574 = vperm.xlu0 %573, %v463
        %v575 = vpop.permute.xlu0 %574
        %577 = vset.pattern.permute.xlu0 2
        %578 = vperm.xlu0 %577, %v464
        %v579 = vpop.permute.xlu0 %578
        %581 = vset.pattern.permute.xlu0 2
        %582 = vperm.xlu0 %581, %v465
        %v583 = vpop.permute.xlu0 %582
        %v585 = vadd.f32 %v565, %v571
        %v586 = vadd.f32 %v566, %v575
        %v587 = vadd.f32 %v567, %v579
        %v588 = vadd.f32 %v568, %v583
        %589 = vst.msk [vmem:[%s246] sm:$0xff] %vm454, %v585
        %590 = vst.msk [vmem:[%s246 + $0x8] sm:$0xff] %vm454, %v586
        %591 = vst.msk [vmem:[%s246 + $0x10] sm:$0xff] %vm454, %v587
        %592 = vst.msk [vmem:[%s246 + $0x18] sm:$0xff] %vm454, %v588
      $region40: #{_fixed_patch_embed_impl.1} parent=31 // pred_fallthru
        _
      %p593 = scmp.lt.s32.totalorder %s19, 1
      %s594 = scalar_select %p593, %s19, 1
      %p595 = scmp.lt.s32.totalorder %s20, 0
      %s596 = scalar_select %p595, %s20, 0
      %s597 = smul.addr %s594, 4
      %s598 = sadd.s32 %s596, %s597
      %s599 = smul.addr %s598, 8
      %s600 = scalar_lea.vmem %s3, %s599
      // Predicated region
      $region41: #{_fixed_patch_embed_impl.1} parent=31 // pred_check
        %p601 = pneg %p130
      $region42: #{_fixed_patch_embed_impl.1} parent=31 // pred_check_branch
        %603 = sbr.rel (%p601) target = $region44
      $region43: #{_fixed_patch_embed_impl.1} parent=31 // pred_region
        _
      $region44: #{_fixed_patch_embed_impl.1} parent=31 // pred_fallthru
        _
    $region32: #{_fixed_patch_embed_impl.1} parent=5 // pred_fallthru
      _
    %p604 = scmp.le.s32.totalorder 2, %s9
    // Predicated region
    $region45: #{_fixed_patch_embed_impl.1} parent=5 // pred_check
      %p605 = pneg %p604
    $region46: #{_fixed_patch_embed_impl.1} parent=5 // pred_check_branch
      %607 = sbr.rel (%p605) target = $region48
    $region47: #{_fixed_patch_embed_impl.1} parent=5 // pred_region
      %s608 = ssub.s32 %s9, 2
      // Predicated region
      $region49: #{_fixed_patch_embed_impl.1} parent=47 // pred_check
        %p609 = pneg %p136
      $region50: #{_fixed_patch_embed_impl.1} parent=47 // pred_check_branch
        %611 = sbr.rel (%p609) target = $region52
      $region51: #{_fixed_patch_embed_impl.1} parent=47 // pred_region
        %p612 = scmp.lt.s32.totalorder %s22, 1
        %s613 = scalar_select %p612, %s22, 1
        %p614 = scmp.lt.s32.totalorder %s23, 0
        %s615 = scalar_select %p614, %s23, 0
        %s616 = smul.addr %s613, 4
        %s617 = sadd.s32 %s615, %s616
        %s618 = smul.addr %s617, 8
        %s619 = scalar_lea.vmem %s3, %s618
      $region52: #{_fixed_patch_embed_impl.1} parent=47 // pred_fallthru
        _
    $region48: #{_fixed_patch_embed_impl.1} parent=5 // pred_fallthru
      _
  $region6: #{_fixed_patch_embed_impl.1} parent=0 // loop_footer
    %s13 = sadd.s32 1, %s9
  $region7: #{_fixed_patch_embed_impl.1} parent=0 // loop_footer_branch
    %8 = sbr.rel target = $region3
  $region8: #{_fixed_patch_embed_impl.1} parent=0 // loop_exit
    _

</llo_original>
